<compile_context>
chip_gen: v7x
topology: tpu7x:2x2x1
jax: 0.10.0
libtpu: 0.0.40
codegen_flags: <defaults>
</compile_context>

<pallas_src>
import functools

import jax
import jax.numpy as jnp
import numpy as np
from jax.experimental import pallas as pl
from jax.experimental.pallas import tpu as pltpu


def _round_up(x, m):
    return (x + m - 1) // m * m


def _pick_time_chunk(T, Bp, E, Hp, budget_bytes=8 << 20):
    """Largest divisor of T whose per-chunk VMEM working set fits the budget."""
    per_t = Bp * (2 * 2 * E        # emb chunk, bf16, double-buffered
                  + 4 * 3 * Hp     # gi scratch, f32
                  + 2 * 4 * Hp)    # out chunk, f32, double-buffered
    max_tc = max(1, budget_bytes // max(per_t, 1))
    tc = 1
    for cand in range(1, T + 1):
        if T % cand == 0 and cand <= max_tc:
            tc = cand
    return tc


# ---------------------------------------------------------------------------
# Fused bidirectional GRU kernel.
# Grid = (direction, time-chunk).  Direction axis is "parallel" (one per TC on
# megacore chips); the time-chunk axis is "arbitrary" and carries h in VMEM
# scratch.  The backward direction walks chunks (and steps within a chunk) in
# reverse via in-kernel / index_map arithmetic — no materialized [::-1] copies.
# ---------------------------------------------------------------------------
def _bigru_kernel(emb_ref, wih_ref, whh_ref, bgi_ref, bhn_ref,
                  out_ref, hid_ref, h_scratch, gi_scratch):
    """emb_ref : (tc*Bp, E)    bf16  embedded rows of this time chunk
    wih_ref : (E, 3Hp)      bf16  input weights (transposed), gates r|z|n
    whh_ref : (Hp, 3Hp)     f32   hidden weights (transposed)
    bgi_ref : (1, 3Hp)      f32   b_ih + [b_hh_r, b_hh_z, 0]
    bhn_ref : (1, Hp)       f32   b_hh_n (inside the r * (.) term)
    out_ref : (tc, Bp, Hp)  f32   this direction's h_t for the chunk
    hid_ref : (Bp, Hp)      f32   final hidden (resident block, last write wins)
    h_scratch : (Bp, Hp)    f32   hidden state carried across time chunks
    gi_scratch: (tc*Bp, 3Hp) f32  input-side gate pre-activations (chunk)
    """
    d = pl.program_id(0)                    # 0 = forward, 1 = backward
    c = pl.program_id(1)                    # chunk index in grid order
    tc, Bp, Hp = out_ref.shape

    @pl.when(c == 0)
    def _():
        h_scratch[...] = jnp.zeros_like(h_scratch)

    # Hoisted input projection for the whole chunk: one bf16 MXU matmul with
    # f32 accumulation, biases pre-folded.
    gi_scratch[...] = (
        jnp.dot(emb_ref[...], wih_ref[...], preferred_element_type=jnp.float32)
        + bgi_ref[...])

    whh = whh_ref[...]                                   # hoisted out of loop
    b_hn = jnp.broadcast_to(bhn_ref[...], (Bp, Hp))      # hoisted broadcast

    def step(i, h):
        # forward (d==0): local step i ; backward (d==1): local step tc-1-i
        t_loc = d * (tc - 1) + (1 - 2 * d) * i
        row = pl.multiple_of(t_loc * Bp, Bp)
        g = gi_scratch[pl.ds(row, Bp), :]                            # (Bp, 3Hp)
        gh = jnp.dot(h, whh, preferred_element_type=jnp.float32)     # (Bp, 3Hp)
        r = jax.nn.sigmoid(g[:, 0:Hp] + gh[:, 0:Hp])
        z = jax.nn.sigmoid(g[:, Hp:2 * Hp] + gh[:, Hp:2 * Hp])
        n = jnp.tanh(g[:, 2 * Hp:] + r * (gh[:, 2 * Hp:] + b_hn))
        h_new = (1.0 - z) * n + z * h
        out_ref[t_loc] = h_new                           # lane-dense store
        return h_new

    h_final = jax.lax.fori_loop(0, tc, step, h_scratch[...],
                                unroll=min(tc, 8))       # partial unroll
    h_scratch[...] = h_final
    hid_ref[...] = h_final        # block is resident across chunks; the write
                                  # from the final chunk is what lands in HBM


# ---------------------------------------------------------------------------
# Wrapper replicating Encoder.forward (eval mode).
# ---------------------------------------------------------------------------
def encoder_forward(src, params, time_chunk=None):
    """src: (T, B) int32 token ids (seq-first, nn.GRU batch_first=False).
    Returns (outputs, hidden): (T, B, 2H), (2, B, H)  [dir 0 = fwd, 1 = bwd].
    """
    T, B = src.shape
    emb_table = params["embedding"].astype(jnp.float32)
    E = emb_table.shape[1]
    H = params["w_hh_f"].shape[1]

    Hp = _round_up(H, 128)    # lane-dense gate slices / stores
    Bp = _round_up(B, 8)      # sublane-dense rows

    # Embedding lookup (XLA gather glue); Dropout(p=0.5) eval mode = identity.
    embedded = jnp.take(emb_table, src, axis=0)                     # (T, B, E)
    embedded = jnp.pad(embedded, ((0, 0), (0, Bp - B), (0, 0)))
    emb_flat = embedded.reshape(T * Bp, E).astype(jnp.bfloat16)     # (T*Bp, E)

    # Per-direction weights, transposed and per-gate zero-padded H -> Hp.
    # Zero padding is exact: padded gate columns stay at h = 0 forever.
    def pad_gate_cols(w, axis):
        r, z, n = jnp.split(w, 3, axis=axis)
        pad = [(0, 0)] * w.ndim
        pad[axis] = (0, Hp - H)
        p = lambda a: jnp.pad(a, pad)
        return jnp.concatenate([p(r), p(z), p(n)], axis=axis)

    def prep_dir(w_ih, w_hh, b_ih, b_hh):
        wih_t = pad_gate_cols(w_ih.T, axis=1)                        # (E, 3Hp)
        whh_t = pad_gate_cols(jnp.pad(w_hh.T, ((0, Hp - H), (0, 0))),
                              axis=1)                                # (Hp, 3Hp)
        # Fold b_ih (all gates) + b_hh (r, z only) into the projection bias.
        b_gi = pad_gate_cols(
            b_ih + jnp.concatenate([b_hh[:2 * H],
                                    jnp.zeros((H,), b_hh.dtype)]), axis=0)
        b_hn = jnp.pad(b_hh[2 * H:], (0, Hp - H))                    # (Hp,)
        return wih_t, whh_t, b_gi, b_hn

    f = prep_dir(params["w_ih_f"], params["w_hh_f"],
                 params["b_ih_f"], params["b_hh_f"])
    b = prep_dir(params["w_ih_b"], params["w_hh_b"],
                 params["b_ih_b"], params["b_hh_b"])

    wih = jnp.stack([f[0], b[0]]).astype(jnp.bfloat16)               # (2,E,3Hp)
    whh = jnp.stack([f[1], b[1]]).astype(jnp.float32)                # (2,Hp,3Hp)
    bgi = jnp.stack([f[2], b[2]])[:, None, :].astype(jnp.float32)    # (2,1,3Hp)
    bhn = jnp.stack([f[3], b[3]])[:, None, :].astype(jnp.float32)    # (2,1,Hp)

    tc = time_chunk if time_chunk is not None else _pick_time_chunk(T, Bp, E, Hp)
    assert T % tc == 0, "time_chunk must divide the sequence length"
    nc = T // tc

    def time_block(d, c):
        # Forward walks chunks 0..nc-1; backward walks nc-1..0.
        return d * (nc - 1) + (1 - 2 * d) * c

    cost = pl.CostEstimate(
        flops=2 * (2 * T * Bp * E * 3 * Hp          # input projection
                   + T * 2 * Bp * Hp * 3 * Hp       # recurrent matmuls
                   + T * 12 * Bp * Hp),             # gate elementwise
        transcendentals=2 * T * Bp * 3 * Hp,
        bytes_accessed=(2 * T * Bp * E * 2                       # emb (bf16, per dir)
                        + 2 * (E * 3 * Hp * 2 + Hp * 3 * Hp * 4  # weights
                               + 3 * Hp * 4 + Hp * 4)            # biases
                        + T * Bp * 2 * Hp * 4 + 2 * Bp * Hp * 4))

    out_pad, hid_pad = pl.pallas_call(
        _bigru_kernel,
        out_shape=(jax.ShapeDtypeStruct((T, Bp, 2 * Hp), jnp.float32),
                   jax.ShapeDtypeStruct((2, Bp, Hp), jnp.float32)),
        grid=(2, nc),
        in_specs=[
            pl.BlockSpec((tc * Bp, E), lambda d, c: (time_block(d, c), 0)),
            pl.BlockSpec((None, E, 3 * Hp), lambda d, c: (d, 0, 0)),
            pl.BlockSpec((None, Hp, 3 * Hp), lambda d, c: (d, 0, 0)),
            pl.BlockSpec((None, 1, 3 * Hp), lambda d, c: (d, 0, 0)),
            pl.BlockSpec((None, 1, Hp), lambda d, c: (d, 0, 0)),
        ],
        out_specs=(
            pl.BlockSpec((tc, Bp, Hp), lambda d, c: (time_block(d, c), 0, d)),
            pl.BlockSpec((None, Bp, Hp), lambda d, c: (d, 0, 0)),
        ),
        scratch_shapes=[pltpu.VMEM((Bp, Hp), jnp.float32),
                        pltpu.VMEM((tc * Bp, 3 * Hp), jnp.float32)],
        compiler_params=pltpu.CompilerParams(
            dimension_semantics=("parallel", "arbitrary")),
        cost_estimate=cost,
    )(emb_flat, wih, whh, bgi, bhn)

    if Hp == H and Bp == B:
        # Realistic (H % 128 == 0, B % 8 == 0) case: kernel output is final.
        outputs, hidden = out_pad, hid_pad
    else:
        outputs = jnp.concatenate(
            [out_pad[:, :B, :H], out_pad[:, :B, Hp:Hp + H]], axis=-1)
        hidden = hid_pad[:, :B, :H]
    return outputs, hidden


# ---------------------------------------------------------------------------
# Pure-JAX reference (lax.scan) for correctness checking.
# ---------------------------------------------------------------------------
def encoder_reference(src, params):
    emb = params["embedding"]
    embedded = jnp.take(emb, src, axis=0).astype(jnp.float32)
    H = params["w_hh_f"].shape[1]
    B = src.shape[1]

    def make_step(w_ih, w_hh, b_ih, b_hh):
        def step(h, x):
            gi = x @ w_ih.T + b_ih
            gh = h @ w_hh.T + b_hh
            i_r, i_z, i_n = jnp.split(gi, 3, axis=-1)
            h_r, h_z, h_n = jnp.split(gh, 3, axis=-1)
            r = jax.nn.sigmoid(i_r + h_r)
            z = jax.nn.sigmoid(i_z + h_z)
            n = jnp.tanh(i_n + r * h_n)
            h_new = (1.0 - z) * n + z * h
            return h_new, h_new
        return step

    h0 = jnp.zeros((B, H), jnp.float32)
    _, fwd = jax.lax.scan(
        make_step(params["w_ih_f"], params["w_hh_f"],
                  params["b_ih_f"], params["b_hh_f"]), h0, embedded)
    _, bwd_rev = jax.lax.scan(
        make_step(params["w_ih_b"], params["w_hh_b"],
                  params["b_ih_b"], params["b_hh_b"]), h0, embedded[::-1])
    bwd = bwd_rev[::-1]
    outputs = jnp.concatenate([fwd, bwd], axis=-1)
    hidden = jnp.stack([fwd[-1], bwd_rev[-1]], axis=0)
    return outputs, hidden


def init_params(key, vocab_size, embed_size, hidden_size):
    keys = jax.random.split(key, 9)
    k = 1.0 / np.sqrt(hidden_size)
    u = lambda kk, shape: jax.random.uniform(kk, shape, jnp.float32, -k, k)
    return {
        "embedding": jax.random.normal(keys[0], (vocab_size, embed_size),
                                       jnp.float32),
        # forward direction
        "w_ih_f": u(keys[1], (3 * hidden_size, embed_size)),
        "w_hh_f": u(keys[2], (3 * hidden_size, hidden_size)),
        "b_ih_f": u(keys[3], (3 * hidden_size,)),
        "b_hh_f": u(keys[4], (3 * hidden_size,)),
        # backward direction
        "w_ih_b": u(keys[5], (3 * hidden_size, embed_size)),
        "w_hh_b": u(keys[6], (3 * hidden_size, hidden_size)),
        "b_ih_b": u(keys[7], (3 * hidden_size,)),
        "b_hh_b": u(keys[8], (3 * hidden_size,)),
    }


if __name__ == "__main__":
    vocab_size, embed_size, hidden_size = 20, 16, 32
    T, B = 8, 4

    key = jax.random.PRNGKey(0)
    k_params, k_src = jax.random.split(key)
    params = init_params(k_params, vocab_size, embed_size, hidden_size)
    src = jax.random.randint(k_src, (T, B), 0, vocab_size, dtype=jnp.int32)

    fwd_fn = jax.jit(functools.partial(encoder_forward, time_chunk=4))
    outputs, hidden = fwd_fn(src, params)
    jax.block_until_ready((outputs, hidden))

    ref_out, ref_hid = encoder_reference(src, params)
    assert outputs.shape == (T, B, 2 * hidden_size)
    assert hidden.shape == (2, B, hidden_size)
    # bf16 input projection (f32 accumulation) -> loosened tolerance.
    np.testing.assert_allclose(np.asarray(outputs), np.asarray(ref_out),
                               rtol=2e-2, atol=2e-2)
    np.testing.assert_allclose(np.asarray(hidden), np.asarray(ref_hid),
                               rtol=2e-2, atol=2e-2)

    print("KERNEL_OK")
</pallas_src>

<mosaic_0001>
module attributes {stable_mosaic.version = 11 : i64} {
  func.func @_bigru_kernel(%arg0: i32, %arg1: i32, %arg2: memref<32x16xbf16, #tpu.memory_space<vmem>>, %arg3: memref<1x16x384xbf16, #tpu.memory_space<vmem>>, %arg4: memref<1x128x384xf32, #tpu.memory_space<vmem>>, %arg5: memref<1x1x384xf32, #tpu.memory_space<vmem>>, %arg6: memref<1x1x128xf32, #tpu.memory_space<vmem>>, %arg7: memref<4x8x128xf32, #tpu.memory_space<vmem>>, %arg8: memref<1x8x128xf32, #tpu.memory_space<vmem>>, %arg9: memref<8x128xf32, #tpu.memory_space<vmem>>, %arg10: memref<32x384xf32, #tpu.memory_space<vmem>>) attributes {dimension_semantics = [#tpu.dimension_semantics<parallel>, #tpu.dimension_semantics<arbitrary>], iteration_bounds = array<i64: 2, 2>, scalar_prefetch = 0 : i64, scratch_operands = 2 : i64, tpu.core_type = #tpu.core_type<tc>, window_params = [{transform_indices = @transform_0, window_bounds = array<i64: 32, 16>}, {transform_indices = @transform_1, window_bounds = array<i64: 1, 16, 384>}, {transform_indices = @transform_2, window_bounds = array<i64: 1, 128, 384>}, {transform_indices = @transform_3, window_bounds = array<i64: 1, 1, 384>}, {transform_indices = @transform_4, window_bounds = array<i64: 1, 1, 128>}, {transform_indices = @transform_5, window_bounds = array<i64: 4, 8, 128>}, {transform_indices = @transform_6, window_bounds = array<i64: 1, 8, 128>}]} {
    %c0_i32 = arith.constant 0 : i32
    %0 = arith.cmpi eq, %arg1, %c0_i32 : i32
    %1 = arith.extui %0 : i1 to i32
    %c0_i32_0 = arith.constant 0 : i32
    %2 = arith.cmpi ne, %1, %c0_i32_0 : i32
    scf.if %2 {
      %cst_67 = arith.constant 0.000000e+00 : f32
      %187 = vector.broadcast %cst_67 : f32 to vector<8x128xf32>
      %c0_68 = arith.constant 0 : index
      %c0_69 = arith.constant 0 : index
      %188 = vector.load %arg9[%c0_68, %c0_69] : memref<8x128xf32, #tpu.memory_space<vmem>>, vector<8x128xf32>
      tpu.vector_store %arg9[%c0_68, %c0_69], %187 {strides = array<i32>} : memref<8x128xf32, #tpu.memory_space<vmem>>, vector<8x128xf32>,
    } else {
    }
    %c0 = arith.constant 0 : index
    %c0_1 = arith.constant 0 : index
    %3 = vector.load %arg2[%c0, %c0_1] : memref<32x16xbf16, #tpu.memory_space<vmem>>, vector<32x16xbf16>
    %c0_2 = arith.constant 0 : index
    %c0_3 = arith.constant 0 : index
    %c0_4 = arith.constant 0 : index
    %4 = vector.load %arg3[%c0_2, %c0_3, %c0_4] : memref<1x16x384xbf16, #tpu.memory_space<vmem>>, vector<1x16x384xbf16>
    %5 = vector.shape_cast %4 : vector<1x16x384xbf16> to vector<16x384xbf16>
    %cst = arith.constant dense<0.000000e+00> : vector<32x384xf32>
    %6 = tpu.matmul %3, %5, %cst {dimension_numbers = #tpu.dot_dimension_numbers<[1], [0], [0], [1], [0, 0, 1, 1], [], []>} : vector<32x16xbf16>, vector<16x384xbf16>, vector<32x384xf32> -> vector<32x384xf32>
    %c0_5 = arith.constant 0 : index
    %c0_6 = arith.constant 0 : index
    %c0_7 = arith.constant 0 : index
    %7 = vector.load %arg5[%c0_5, %c0_6, %c0_7] : memref<1x1x384xf32, #tpu.memory_space<vmem>>, vector<1x1x384xf32>
    %8 = vector.shape_cast %7 : vector<1x1x384xf32> to vector<1x384xf32>
    %9 = vector.broadcast %8 : vector<1x384xf32> to vector<32x384xf32>
    %10 = arith.addf %6, %9 : vector<32x384xf32>
    %c0_8 = arith.constant 0 : index
    %c0_9 = arith.constant 0 : index
    %11 = vector.load %arg10[%c0_8, %c0_9] : memref<32x384xf32, #tpu.memory_space<vmem>>, vector<32x384xf32>
    tpu.vector_store %arg10[%c0_8, %c0_9], %10 {strides = array<i32>} : memref<32x384xf32, #tpu.memory_space<vmem>>, vector<32x384xf32>,
    %c0_10 = arith.constant 0 : index
    %c0_11 = arith.constant 0 : index
    %c0_12 = arith.constant 0 : index
    %12 = vector.load %arg4[%c0_10, %c0_11, %c0_12] : memref<1x128x384xf32, #tpu.memory_space<vmem>>, vector<1x128x384xf32>
    %13 = vector.shape_cast %12 : vector<1x128x384xf32> to vector<128x384xf32>
    %c0_13 = arith.constant 0 : index
    %c0_14 = arith.constant 0 : index
    %c0_15 = arith.constant 0 : index
    %14 = vector.load %arg6[%c0_13, %c0_14, %c0_15] : memref<1x1x128xf32, #tpu.memory_space<vmem>>, vector<1x1x128xf32>
    %15 = vector.shape_cast %14 : vector<1x1x128xf32> to vector<1x128xf32>
    %16 = vector.shape_cast %15 : vector<1x128xf32> to vector<1x128xf32>
    %17 = vector.broadcast %16 : vector<1x128xf32> to vector<8x128xf32>
    %c0_16 = arith.constant 0 : index
    %c0_17 = arith.constant 0 : index
    %18 = vector.load %arg9[%c0_16, %c0_17] : memref<8x128xf32, #tpu.memory_space<vmem>>, vector<8x128xf32>
    %c0_i32_18 = arith.constant 0 : i32
    %c3_i32 = arith.constant 3 : i32
    %19 = arith.muli %arg0, %c3_i32 : i32
    %c2_i32 = arith.constant 2 : i32
    %20 = arith.muli %c2_i32, %arg0 : i32
    %c1_i32 = arith.constant 1 : i32
    %21 = arith.subi %c1_i32, %20 : i32
    %22 = arith.muli %21, %c0_i32_18 : i32
    %23 = arith.addi %19, %22 : i32
    %c8_i32 = arith.constant 8 : i32
    %24 = arith.muli %23, %c8_i32 : i32
    %25 = tpu.assume_multiple %24, 8 : i32
    %26 = arith.index_cast %25 : i32 to index
    %c0_19 = arith.constant 0 : index
    %27 = vector.load %arg10[%26, %c0_19] : memref<32x384xf32, #tpu.memory_space<vmem>>, vector<8x384xf32>
    %cst_20 = arith.constant dense<0.000000e+00> : vector<8x384xf32>
    %28 = tpu.matmul %18, %13, %cst_20 {dimension_numbers = #tpu.dot_dimension_numbers<[1], [0], [0], [1], [0, 0, 1, 1], [], []>} : vector<8x128xf32>, vector<128x384xf32>, vector<8x384xf32> -> vector<8x384xf32>
    %29 = vector.extract_strided_slice %27 {offsets = [0, 0], sizes = [8, 128], strides = [1, 1]} : vector<8x384xf32> to vector<8x128xf32>
    %30 = vector.extract_strided_slice %28 {offsets = [0, 0], sizes = [8, 128], strides = [1, 1]} : vector<8x384xf32> to vector<8x128xf32>
    %31 = arith.addf %29, %30 : vector<8x128xf32>
    %32 = arith.negf %31 : vector<8x128xf32>
    %33 = math.exp %32 : vector<8x128xf32>
    %cst_21 = arith.constant 1.000000e+00 : f32
    %34 = vector.broadcast %cst_21 : f32 to vector<8x128xf32>
    %35 = arith.addf %34, %33 : vector<8x128xf32>
    %36 = arith.divf %34, %35 : vector<8x128xf32>
    %37 = vector.extract_strided_slice %27 {offsets = [0, 128], sizes = [8, 128], strides = [1, 1]} : vector<8x384xf32> to vector<8x128xf32>
    %38 = vector.extract_strided_slice %28 {offsets = [0, 128], sizes = [8, 128], strides = [1, 1]} : vector<8x384xf32> to vector<8x128xf32>
    %39 = arith.addf %37, %38 : vector<8x128xf32>
    %40 = arith.negf %39 : vector<8x128xf32>
    %41 = math.exp %40 : vector<8x128xf32>
    %cst_22 = arith.constant 1.000000e+00 : f32
    %42 = vector.broadcast %cst_22 : f32 to vector<8x128xf32>
    %43 = arith.addf %42, %41 : vector<8x128xf32>
    %44 = arith.divf %42, %43 : vector<8x128xf32>
    %45 = vector.extract_strided_slice %27 {offsets = [0, 256], sizes = [8, 128], strides = [1, 1]} : vector<8x384xf32> to vector<8x128xf32>
    %46 = vector.extract_strided_slice %28 {offsets = [0, 256], sizes = [8, 128], strides = [1, 1]} : vector<8x384xf32> to vector<8x128xf32>
    %47 = arith.addf %46, %17 : vector<8x128xf32>
    %48 = arith.mulf %36, %47 : vector<8x128xf32>
    %49 = arith.addf %45, %48 : vector<8x128xf32>
    %50 = math.tanh %49 : vector<8x128xf32>
    %cst_23 = arith.constant 1.000000e+00 : f32
    %51 = vector.broadcast %cst_23 : f32 to vector<8x128xf32>
    %52 = arith.subf %51, %44 : vector<8x128xf32>
    %53 = arith.mulf %52, %50 : vector<8x128xf32>
    %54 = arith.mulf %44, %18 : vector<8x128xf32>
    %55 = arith.addf %53, %54 : vector<8x128xf32>
    %56 = arith.index_cast %23 : i32 to index
    %c0_24 = arith.constant 0 : index
    %c0_25 = arith.constant 0 : index
    %57 = vector.load %arg7[%56, %c0_24, %c0_25] : memref<4x8x128xf32, #tpu.memory_space<vmem>>, vector<1x8x128xf32>
    %58 = vector.shape_cast %57 : vector<1x8x128xf32> to vector<8x128xf32>
    %59 = vector.shape_cast %55 : vector<8x128xf32> to vector<1x8x128xf32>
    tpu.vector_store %arg7[%56, %c0_24, %c0_25], %59 {strides = array<i32>} : memref<4x8x128xf32, #tpu.memory_space<vmem>>, vector<1x8x128xf32>,
    %c1_i32_26 = arith.constant 1 : i32
    %c3_i32_27 = arith.constant 3 : i32
    %60 = arith.muli %arg0, %c3_i32_27 : i32
    %c2_i32_28 = arith.constant 2 : i32
    %61 = arith.muli %c2_i32_28, %arg0 : i32
    %c1_i32_29 = arith.constant 1 : i32
    %62 = arith.subi %c1_i32_29, %61 : i32
    %63 = arith.muli %62, %c1_i32_26 : i32
    %64 = arith.addi %60, %63 : i32
    %c8_i32_30 = arith.constant 8 : i32
    %65 = arith.muli %64, %c8_i32_30 : i32
    %66 = tpu.assume_multiple %65, 8 : i32
    %67 = arith.index_cast %66 : i32 to index
    %c0_31 = arith.constant 0 : index
    %68 = vector.load %arg10[%67, %c0_31] : memref<32x384xf32, #tpu.memory_space<vmem>>, vector<8x384xf32>
    %cst_32 = arith.constant dense<0.000000e+00> : vector<8x384xf32>
    %69 = tpu.matmul %55, %13, %cst_32 {dimension_numbers = #tpu.dot_dimension_numbers<[1], [0], [0], [1], [0, 0, 1, 1], [], []>} : vector<8x128xf32>, vector<128x384xf32>, vector<8x384xf32> -> vector<8x384xf32>
    %70 = vector.extract_strided_slice %68 {offsets = [0, 0], sizes = [8, 128], strides = [1, 1]} : vector<8x384xf32> to vector<8x128xf32>
    %71 = vector.extract_strided_slice %69 {offsets = [0, 0], sizes = [8, 128], strides = [1, 1]} : vector<8x384xf32> to vector<8x128xf32>
    %72 = arith.addf %70, %71 : vector<8x128xf32>
    %73 = arith.negf %72 : vector<8x128xf32>
    %74 = math.exp %73 : vector<8x128xf32>
    %cst_33 = arith.constant 1.000000e+00 : f32
    %75 = vector.broadcast %cst_33 : f32 to vector<8x128xf32>
    %76 = arith.addf %75, %74 : vector<8x128xf32>
    %77 = arith.divf %75, %76 : vector<8x128xf32>
    %78 = vector.extract_strided_slice %68 {offsets = [0, 128], sizes = [8, 128], strides = [1, 1]} : vector<8x384xf32> to vector<8x128xf32>
    %79 = vector.extract_strided_slice %69 {offsets = [0, 128], sizes = [8, 128], strides = [1, 1]} : vector<8x384xf32> to vector<8x128xf32>
    %80 = arith.addf %78, %79 : vector<8x128xf32>
    %81 = arith.negf %80 : vector<8x128xf32>
    %82 = math.exp %81 : vector<8x128xf32>
    %cst_34 = arith.constant 1.000000e+00 : f32
    %83 = vector.broadcast %cst_34 : f32 to vector<8x128xf32>
    %84 = arith.addf %83, %82 : vector<8x128xf32>
    %85 = arith.divf %83, %84 : vector<8x128xf32>
    %86 = vector.extract_strided_slice %68 {offsets = [0, 256], sizes = [8, 128], strides = [1, 1]} : vector<8x384xf32> to vector<8x128xf32>
    %87 = vector.extract_strided_slice %69 {offsets = [0, 256], sizes = [8, 128], strides = [1, 1]} : vector<8x384xf32> to vector<8x128xf32>
    %88 = arith.addf %87, %17 : vector<8x128xf32>
    %89 = arith.mulf %77, %88 : vector<8x128xf32>
    %90 = arith.addf %86, %89 : vector<8x128xf32>
    %91 = math.tanh %90 : vector<8x128xf32>
    %cst_35 = arith.constant 1.000000e+00 : f32
    %92 = vector.broadcast %cst_35 : f32 to vector<8x128xf32>
    %93 = arith.subf %92, %85 : vector<8x128xf32>
    %94 = arith.mulf %93, %91 : vector<8x128xf32>
    %95 = arith.mulf %85, %55 : vector<8x128xf32>
    %96 = arith.addf %94, %95 : vector<8x128xf32>
    %97 = arith.index_cast %64 : i32 to index
    %c0_36 = arith.constant 0 : index
    %c0_37 = arith.constant 0 : index
    %98 = vector.load %arg7[%97, %c0_36, %c0_37] : memref<4x8x128xf32, #tpu.memory_space<vmem>>, vector<1x8x128xf32>
    %99 = vector.shape_cast %98 : vector<1x8x128xf32> to vector<8x128xf32>
    %100 = vector.shape_cast %96 : vector<8x128xf32> to vector<1x8x128xf32>
    tpu.vector_store %arg7[%97, %c0_36, %c0_37], %100 {strides = array<i32>} : memref<4x8x128xf32, #tpu.memory_space<vmem>>, vector<1x8x128xf32>,
    %c2_i32_38 = arith.constant 2 : i32
    %c3_i32_39 = arith.constant 3 : i32
    %101 = arith.muli %arg0, %c3_i32_39 : i32
    %c2_i32_40 = arith.constant 2 : i32
    %102 = arith.muli %c2_i32_40, %arg0 : i32
    %c1_i32_41 = arith.constant 1 : i32
    %103 = arith.subi %c1_i32_41, %102 : i32
    %104 = arith.muli %103, %c2_i32_38 : i32
    %105 = arith.addi %101, %104 : i32
    %c8_i32_42 = arith.constant 8 : i32
    %106 = arith.muli %105, %c8_i32_42 : i32
    %107 = tpu.assume_multiple %106, 8 : i32
    %108 = arith.index_cast %107 : i32 to index
    %c0_43 = arith.constant 0 : index
    %109 = vector.load %arg10[%108, %c0_43] : memref<32x384xf32, #tpu.memory_space<vmem>>, vector<8x384xf32>
    %cst_44 = arith.constant dense<0.000000e+00> : vector<8x384xf32>
    %110 = tpu.matmul %96, %13, %cst_44 {dimension_numbers = #tpu.dot_dimension_numbers<[1], [0], [0], [1], [0, 0, 1, 1], [], []>} : vector<8x128xf32>, vector<128x384xf32>, vector<8x384xf32> -> vector<8x384xf32>
    %111 = vector.extract_strided_slice %109 {offsets = [0, 0], sizes = [8, 128], strides = [1, 1]} : vector<8x384xf32> to vector<8x128xf32>
    %112 = vector.extract_strided_slice %110 {offsets = [0, 0], sizes = [8, 128], strides = [1, 1]} : vector<8x384xf32> to vector<8x128xf32>
    %113 = arith.addf %111, %112 : vector<8x128xf32>
    %114 = arith.negf %113 : vector<8x128xf32>
    %115 = math.exp %114 : vector<8x128xf32>
    %cst_45 = arith.constant 1.000000e+00 : f32
    %116 = vector.broadcast %cst_45 : f32 to vector<8x128xf32>
    %117 = arith.addf %116, %115 : vector<8x128xf32>
    %118 = arith.divf %116, %117 : vector<8x128xf32>
    %119 = vector.extract_strided_slice %109 {offsets = [0, 128], sizes = [8, 128], strides = [1, 1]} : vector<8x384xf32> to vector<8x128xf32>
    %120 = vector.extract_strided_slice %110 {offsets = [0, 128], sizes = [8, 128], strides = [1, 1]} : vector<8x384xf32> to vector<8x128xf32>
    %121 = arith.addf %119, %120 : vector<8x128xf32>
    %122 = arith.negf %121 : vector<8x128xf32>
    %123 = math.exp %122 : vector<8x128xf32>
    %cst_46 = arith.constant 1.000000e+00 : f32
    %124 = vector.broadcast %cst_46 : f32 to vector<8x128xf32>
    %125 = arith.addf %124, %123 : vector<8x128xf32>
    %126 = arith.divf %124, %125 : vector<8x128xf32>
    %127 = vector.extract_strided_slice %109 {offsets = [0, 256], sizes = [8, 128], strides = [1, 1]} : vector<8x384xf32> to vector<8x128xf32>
    %128 = vector.extract_strided_slice %110 {offsets = [0, 256], sizes = [8, 128], strides = [1, 1]} : vector<8x384xf32> to vector<8x128xf32>
    %129 = arith.addf %128, %17 : vector<8x128xf32>
    %130 = arith.mulf %118, %129 : vector<8x128xf32>
    %131 = arith.addf %127, %130 : vector<8x128xf32>
    %132 = math.tanh %131 : vector<8x128xf32>
    %cst_47 = arith.constant 1.000000e+00 : f32
    %133 = vector.broadcast %cst_47 : f32 to vector<8x128xf32>
    %134 = arith.subf %133, %126 : vector<8x128xf32>
    %135 = arith.mulf %134, %132 : vector<8x128xf32>
    %136 = arith.mulf %126, %96 : vector<8x128xf32>
    %137 = arith.addf %135, %136 : vector<8x128xf32>
    %138 = arith.index_cast %105 : i32 to index
    %c0_48 = arith.constant 0 : index
    %c0_49 = arith.constant 0 : index
    %139 = vector.load %arg7[%138, %c0_48, %c0_49] : memref<4x8x128xf32, #tpu.memory_space<vmem>>, vector<1x8x128xf32>
    %140 = vector.shape_cast %139 : vector<1x8x128xf32> to vector<8x128xf32>
    %141 = vector.shape_cast %137 : vector<8x128xf32> to vector<1x8x128xf32>
    tpu.vector_store %arg7[%138, %c0_48, %c0_49], %141 {strides = array<i32>} : memref<4x8x128xf32, #tpu.memory_space<vmem>>, vector<1x8x128xf32>,
    %c3_i32_50 = arith.constant 3 : i32
    %c3_i32_51 = arith.constant 3 : i32
    %142 = arith.muli %arg0, %c3_i32_51 : i32
    %c2_i32_52 = arith.constant 2 : i32
    %143 = arith.muli %c2_i32_52, %arg0 : i32
    %c1_i32_53 = arith.constant 1 : i32
    %144 = arith.subi %c1_i32_53, %143 : i32
    %145 = arith.muli %144, %c3_i32_50 : i32
    %146 = arith.addi %142, %145 : i32
    %c8_i32_54 = arith.constant 8 : i32
    %147 = arith.muli %146, %c8_i32_54 : i32
    %148 = tpu.assume_multiple %147, 8 : i32
    %149 = arith.index_cast %148 : i32 to index
    %c0_55 = arith.constant 0 : index
    %150 = vector.load %arg10[%149, %c0_55] : memref<32x384xf32, #tpu.memory_space<vmem>>, vector<8x384xf32>
    %cst_56 = arith.constant dense<0.000000e+00> : vector<8x384xf32>
    %151 = tpu.matmul %137, %13, %cst_56 {dimension_numbers = #tpu.dot_dimension_numbers<[1], [0], [0], [1], [0, 0, 1, 1], [], []>} : vector<8x128xf32>, vector<128x384xf32>, vector<8x384xf32> -> vector<8x384xf32>
    %152 = vector.extract_strided_slice %150 {offsets = [0, 0], sizes = [8, 128], strides = [1, 1]} : vector<8x384xf32> to vector<8x128xf32>
    %153 = vector.extract_strided_slice %151 {offsets = [0, 0], sizes = [8, 128], strides = [1, 1]} : vector<8x384xf32> to vector<8x128xf32>
    %154 = arith.addf %152, %153 : vector<8x128xf32>
    %155 = arith.negf %154 : vector<8x128xf32>
    %156 = math.exp %155 : vector<8x128xf32>
    %cst_57 = arith.constant 1.000000e+00 : f32
    %157 = vector.broadcast %cst_57 : f32 to vector<8x128xf32>
    %158 = arith.addf %157, %156 : vector<8x128xf32>
    %159 = arith.divf %157, %158 : vector<8x128xf32>
    %160 = vector.extract_strided_slice %150 {offsets = [0, 128], sizes = [8, 128], strides = [1, 1]} : vector<8x384xf32> to vector<8x128xf32>
    %161 = vector.extract_strided_slice %151 {offsets = [0, 128], sizes = [8, 128], strides = [1, 1]} : vector<8x384xf32> to vector<8x128xf32>
    %162 = arith.addf %160, %161 : vector<8x128xf32>
    %163 = arith.negf %162 : vector<8x128xf32>
    %164 = math.exp %163 : vector<8x128xf32>
    %cst_58 = arith.constant 1.000000e+00 : f32
    %165 = vector.broadcast %cst_58 : f32 to vector<8x128xf32>
    %166 = arith.addf %165, %164 : vector<8x128xf32>
    %167 = arith.divf %165, %166 : vector<8x128xf32>
    %168 = vector.extract_strided_slice %150 {offsets = [0, 256], sizes = [8, 128], strides = [1, 1]} : vector<8x384xf32> to vector<8x128xf32>
    %169 = vector.extract_strided_slice %151 {offsets = [0, 256], sizes = [8, 128], strides = [1, 1]} : vector<8x384xf32> to vector<8x128xf32>
    %170 = arith.addf %169, %17 : vector<8x128xf32>
    %171 = arith.mulf %159, %170 : vector<8x128xf32>
    %172 = arith.addf %168, %171 : vector<8x128xf32>
    %173 = math.tanh %172 : vector<8x128xf32>
    %cst_59 = arith.constant 1.000000e+00 : f32
    %174 = vector.broadcast %cst_59 : f32 to vector<8x128xf32>
    %175 = arith.subf %174, %167 : vector<8x128xf32>
    %176 = arith.mulf %175, %173 : vector<8x128xf32>
    %177 = arith.mulf %167, %137 : vector<8x128xf32>
    %178 = arith.addf %176, %177 : vector<8x128xf32>
    %179 = arith.index_cast %146 : i32 to index
    %c0_60 = arith.constant 0 : index
    %c0_61 = arith.constant 0 : index
    %180 = vector.load %arg7[%179, %c0_60, %c0_61] : memref<4x8x128xf32, #tpu.memory_space<vmem>>, vector<1x8x128xf32>
    %181 = vector.shape_cast %180 : vector<1x8x128xf32> to vector<8x128xf32>
    %182 = vector.shape_cast %178 : vector<8x128xf32> to vector<1x8x128xf32>
    tpu.vector_store %arg7[%179, %c0_60, %c0_61], %182 {strides = array<i32>} : memref<4x8x128xf32, #tpu.memory_space<vmem>>, vector<1x8x128xf32>,
    %c4_i32 = arith.constant 4 : i32
    %c0_62 = arith.constant 0 : index
    %c0_63 = arith.constant 0 : index
    %183 = vector.load %arg9[%c0_62, %c0_63] : memref<8x128xf32, #tpu.memory_space<vmem>>, vector<8x128xf32>
    tpu.vector_store %arg9[%c0_62, %c0_63], %178 {strides = array<i32>} : memref<8x128xf32, #tpu.memory_space<vmem>>, vector<8x128xf32>,
    %c0_64 = arith.constant 0 : index
    %c0_65 = arith.constant 0 : index
    %c0_66 = arith.constant 0 : index
    %184 = vector.load %arg8[%c0_64, %c0_65, %c0_66] : memref<1x8x128xf32, #tpu.memory_space<vmem>>, vector<1x8x128xf32>
    %185 = vector.shape_cast %184 : vector<1x8x128xf32> to vector<8x128xf32>
    %186 = vector.shape_cast %178 : vector<8x128xf32> to vector<1x8x128xf32>
    tpu.vector_store %arg8[%c0_64, %c0_65, %c0_66], %186 {strides = array<i32>} : memref<1x8x128xf32, #tpu.memory_space<vmem>>, vector<1x8x128xf32>,
    return
  }
  func.func @transform_0(%arg0: i32, %arg1: i32) -> (i32, i32) {
    %c1_i32 = arith.constant 1 : i32
    %0 = arith.muli %arg0, %c1_i32 : i32
    %c2_i32 = arith.constant 2 : i32
    %1 = arith.muli %c2_i32, %arg0 : i32
    %c1_i32_0 = arith.constant 1 : i32
    %2 = arith.subi %c1_i32_0, %1 : i32
    %3 = arith.muli %2, %arg1 : i32
    %4 = arith.addi %0, %3 : i32
    %c0_i32 = arith.constant 0 : i32
    %c0_i32_1 = arith.constant 0 : i32
    return %4, %c0_i32 : i32, i32
  }
  func.func @transform_1(%arg0: i32, %arg1: i32) -> (i32, i32, i32) {
    %c0_i32 = arith.constant 0 : i32
    %c0_i32_0 = arith.constant 0 : i32
    %c0_i32_1 = arith.constant 0 : i32
    return %arg0, %c0_i32, %c0_i32_0 : i32, i32, i32
  }
  func.func @transform_2(%arg0: i32, %arg1: i32) -> (i32, i32, i32) {
    %c0_i32 = arith.constant 0 : i32
    %c0_i32_0 = arith.constant 0 : i32
    %c0_i32_1 = arith.constant 0 : i32
    return %arg0, %c0_i32, %c0_i32_0 : i32, i32, i32
  }
  func.func @transform_3(%arg0: i32, %arg1: i32) -> (i32, i32, i32) {
    %c0_i32 = arith.constant 0 : i32
    %c0_i32_0 = arith.constant 0 : i32
    %c0_i32_1 = arith.constant 0 : i32
    return %arg0, %c0_i32, %c0_i32_0 : i32, i32, i32
  }
  func.func @transform_4(%arg0: i32, %arg1: i32) -> (i32, i32, i32) {
    %c0_i32 = arith.constant 0 : i32
    %c0_i32_0 = arith.constant 0 : i32
    %c0_i32_1 = arith.constant 0 : i32
    return %arg0, %c0_i32, %c0_i32_0 : i32, i32, i32
  }
  func.func @transform_5(%arg0: i32, %arg1: i32) -> (i32, i32, i32) {
    %c1_i32 = arith.constant 1 : i32
    %0 = arith.muli %arg0, %c1_i32 : i32
    %c2_i32 = arith.constant 2 : i32
    %1 = arith.muli %c2_i32, %arg0 : i32
    %c1_i32_0 = arith.constant 1 : i32
    %2 = arith.subi %c1_i32_0, %1 : i32
    %3 = arith.muli %2, %arg1 : i32
    %4 = arith.addi %0, %3 : i32
    %c0_i32 = arith.constant 0 : i32
    %c0_i32_1 = arith.constant 0 : i32
    return %4, %c0_i32, %arg0 : i32, i32, i32
  }
  func.func @transform_6(%arg0: i32, %arg1: i32) -> (i32, i32, i32) {
    %c0_i32 = arith.constant 0 : i32
    %c0_i32_0 = arith.constant 0 : i32
    %c0_i32_1 = arith.constant 0 : i32
    return %arg0, %c0_i32, %c0_i32_0 : i32, i32, i32
  }
}

</mosaic_0001>

<llo_original>
// kernel: encoder_forward.1
$region0: #{encoder_forward.1}
  #allocation0 [shape = 'u32[]', space=smem, size = 0x4, offset = 0x4, fixed_abs, tag = 'smem constant byte address 0x4 - core index']
  #allocation1 [shape = 'u32[144,128]{1,0:T(1,128)}', space=vmem, size = 0x12000, scoped, tag = 'internal scratch']
  #allocation2 [shape = 'f32[8,128]{1,0:T(8,128)}', space=vmem, size = 0x1000, scoped, tag = 'scratch operand']
  #allocation3 [shape = 'f32[32,384]{1,0:T(8,128)}', space=vmem, size = 0xc000, scoped, tag = 'scratch operand']
  %s0 = inlined_call_operand.vmem [shape: bf16[64,16], index: 0, kind: input, shape index: {}]
  %s1 = inlined_call_operand.vmem [shape: bf16[2,16,384], index: 1, kind: input, shape index: {}]
  %s2 = inlined_call_operand.vmem [shape: f32[2,128,384], index: 2, kind: input, shape index: {}]
  %s3 = inlined_call_operand.vmem [shape: f32[2,1,384], index: 3, kind: input, shape index: {}]
  %s4 = inlined_call_operand.vmem [shape: f32[2,1,128], index: 4, kind: input, shape index: {}]
  %s5 = inlined_call_operand.vmem [shape: f32[8,8,256], index: 5, kind: output, shape index: {0}]
  %s6 = inlined_call_operand.vmem [shape: f32[2,8,128], index: 6, kind: output, shape index: {1}]
  %7 = xla_tuple %s5, %s6
  %s8 = sld [smem:[#allocation0]]
  $region99: #{encoder_forward.1} parent=0
    _
  %s10 = ssub.s32 1, %s8
  %s11 = scalar_select 0, %s10, %s8
  $region1: #{encoder_forward.1} parent=0
    #allocation4 [shape = 'u8[32768]{0}', space=vmem, size = 0x8000, scoped, tag = 'output window, operand 0']
    loop: start=0, step=1, limit=6
    $region2: #{encoder_forward.1} parent=1 // loop_pre_header
      _
    $region3: #{encoder_forward.1} parent=1 // loop_header
      %s13 = sphi 0, %s17
      %p14 = scmp.ge.s32.totalorder %s13, 6
      %s20 = sphi 0, %s32
      %s21 = sphi 0, %s28
      %s22 = sphi 0, %s20
      %s23 = sphi 0, %s21
      %s24 = sphi 0, %s22
      %s25 = sphi 0, %s23
      %s43 = sphi 0, %s45
      %s46 = sphi 0, %s43
      %s47 = sphi 0, %s46
      %s63 = sphi 0, %s47
      %s69 = sphi 0, %s71
      %s72 = sphi 0, %s69
      %s73 = sphi 0, %s72
      %s89 = sphi 0, %s73
      %s95 = sphi 0, %s97
      %s98 = sphi 0, %s95
      %s99 = sphi 0, %s98
      %s115 = sphi 0, %s99
      %s121 = sphi 0, %s123
      %s124 = sphi 0, %s121
      %s125 = sphi 0, %s124
      %s141 = sphi 0, %s125
      %s147 = sphi 0, %s149
      %s150 = sphi 0, %s147
      %s151 = sphi 0, %s150
      %s167 = sphi 0, %s151
      %s183 = sphi 0, %s185
      %s186 = sphi 0, %s183
      %s187 = sphi 0, %s186
      %s203 = sphi 0, %s187
      %s209 = sphi 0, %s211
      %s212 = sphi 0, %s209
      %s213 = sphi 0, %s212
      %s229 = sphi 0, %s213
    $region4: #{encoder_forward.1} parent=1 // loop_header_branch
      %16 = sbr.rel (%p14) target = $region8
    $region5: #{encoder_forward.1} parent=1 // loop_body
      %s18 = ssub.s32 %s13, 1
      %s19 = ssub.s32 %s13, 2
      %s26 = sadd.s32 1, %s21
      %p27 = scmp.ge.s32.totalorder %s26, 2
      %s28 = scalar_select %p27, 0, %s26
      %s29 = sadd.s32 1, %s20
      %s30 = scalar_select %p27, %s29, %s20
      %p31 = scmp.ge.s32.totalorder %s30, 2
      %s32 = scalar_select %p31, 0, %s30
      %s33 = smul.u32 %s20, 2
      %s34 = ssub.s32 1, %s33
      %s35 = smul.u32 %s34, %s21
      %s36 = sadd.s32 %s20, %s35
      %s37 = smul.u32 %s32, 2
      %s38 = ssub.s32 1, %s37
      %s39 = smul.u32 %s38, %s28
      %s40 = sadd.s32 %s32, %s39
      %s41 = ssub.s32 %s36, %s40
      %p42 = scmp.eq.s32.totalorder %s41, 0
      %s44 = sadd.s32 %s43, 1
      %s45 = scalar_select %p42, %s43, %s44
      %p48 = pneg %p42
      %p49 = scmp.eq.s32.totalorder %s13, 3
      %p50 = por %p48, %p49
      %p51 = scmp.ne.s32.totalorder %s43, %s46
      %p52 = scmp.eq.s32.totalorder %s13, 0
      %p53 = por %p51, %p52
      %p54 = scmp.ne.s32.totalorder %s43, %s46
      %p55 = scmp.eq.s32.totalorder %s18, 3
      %p56 = por %p54, %p55
      %p57 = scmp.ne.s32.totalorder %s46, %s47
      %p58 = scmp.eq.s32.totalorder %s18, 0
      %p59 = por %p57, %p58
      %p60 = scmp.ne.s32.totalorder %s46, %s47
      %p61 = scmp.eq.s32.totalorder %s19, 3
      %p62 = por %p60, %p61
      %p64 = scmp.ne.s32.totalorder %s47, %s63
      %p65 = scmp.eq.s32.totalorder %s19, 0
      %p66 = por %p64, %p65
      %s67 = ssub.s32 %s20, %s32
      %p68 = scmp.eq.s32.totalorder %s67, 0
      %s70 = sadd.s32 %s69, 1
      %s71 = scalar_select %p68, %s69, %s70
      %p74 = pneg %p68
      %p75 = scmp.eq.s32.totalorder %s13, 3
      %p76 = por %p74, %p75
      %p77 = scmp.ne.s32.totalorder %s69, %s72
      %p78 = scmp.eq.s32.totalorder %s13, 0
      %p79 = por %p77, %p78
      %p80 = scmp.ne.s32.totalorder %s69, %s72
      %p81 = scmp.eq.s32.totalorder %s18, 3
      %p82 = por %p80, %p81
      %p83 = scmp.ne.s32.totalorder %s72, %s73
      %p84 = scmp.eq.s32.totalorder %s18, 0
      %p85 = por %p83, %p84
      %p86 = scmp.ne.s32.totalorder %s72, %s73
      %p87 = scmp.eq.s32.totalorder %s19, 3
      %p88 = por %p86, %p87
      %p90 = scmp.ne.s32.totalorder %s73, %s89
      %p91 = scmp.eq.s32.totalorder %s19, 0
      %p92 = por %p90, %p91
      %s93 = ssub.s32 %s20, %s32
      %p94 = scmp.eq.s32.totalorder %s93, 0
      %s96 = sadd.s32 %s95, 1
      %s97 = scalar_select %p94, %s95, %s96
      %p100 = pneg %p94
      %p101 = scmp.eq.s32.totalorder %s13, 3
      %p102 = por %p100, %p101
      %p103 = scmp.ne.s32.totalorder %s95, %s98
      %p104 = scmp.eq.s32.totalorder %s13, 0
      %p105 = por %p103, %p104
      %p106 = scmp.ne.s32.totalorder %s95, %s98
      %p107 = scmp.eq.s32.totalorder %s18, 3
      %p108 = por %p106, %p107
      %p109 = scmp.ne.s32.totalorder %s98, %s99
      %p110 = scmp.eq.s32.totalorder %s18, 0
      %p111 = por %p109, %p110
      %p112 = scmp.ne.s32.totalorder %s98, %s99
      %p113 = scmp.eq.s32.totalorder %s19, 3
      %p114 = por %p112, %p113
      %p116 = scmp.ne.s32.totalorder %s99, %s115
      %p117 = scmp.eq.s32.totalorder %s19, 0
      %p118 = por %p116, %p117
      %s119 = ssub.s32 %s20, %s32
      %p120 = scmp.eq.s32.totalorder %s119, 0
      %s122 = sadd.s32 %s121, 1
      %s123 = scalar_select %p120, %s121, %s122
      %p126 = pneg %p120
      %p127 = scmp.eq.s32.totalorder %s13, 3
      %p128 = por %p126, %p127
      %p129 = scmp.ne.s32.totalorder %s121, %s124
      %p130 = scmp.eq.s32.totalorder %s13, 0
      %p131 = por %p129, %p130
      %p132 = scmp.ne.s32.totalorder %s121, %s124
      %p133 = scmp.eq.s32.totalorder %s18, 3
      %p134 = por %p132, %p133
      %p135 = scmp.ne.s32.totalorder %s124, %s125
      %p136 = scmp.eq.s32.totalorder %s18, 0
      %p137 = por %p135, %p136
      %p138 = scmp.ne.s32.totalorder %s124, %s125
      %p139 = scmp.eq.s32.totalorder %s19, 3
      %p140 = por %p138, %p139
      %p142 = scmp.ne.s32.totalorder %s125, %s141
      %p143 = scmp.eq.s32.totalorder %s19, 0
      %p144 = por %p142, %p143
      %s145 = ssub.s32 %s20, %s32
      %p146 = scmp.eq.s32.totalorder %s145, 0
      %s148 = sadd.s32 %s147, 1
      %s149 = scalar_select %p146, %s147, %s148
      %p152 = pneg %p146
      %p153 = scmp.eq.s32.totalorder %s13, 3
      %p154 = por %p152, %p153
      %p155 = scmp.ne.s32.totalorder %s147, %s150
      %p156 = scmp.eq.s32.totalorder %s13, 0
      %p157 = por %p155, %p156
      %p158 = scmp.ne.s32.totalorder %s147, %s150
      %p159 = scmp.eq.s32.totalorder %s18, 3
      %p160 = por %p158, %p159
      %p161 = scmp.ne.s32.totalorder %s150, %s151
      %p162 = scmp.eq.s32.totalorder %s18, 0
      %p163 = por %p161, %p162
      %p164 = scmp.ne.s32.totalorder %s150, %s151
      %p165 = scmp.eq.s32.totalorder %s19, 3
      %p166 = por %p164, %p165
      %p168 = scmp.ne.s32.totalorder %s151, %s167
      %p169 = scmp.eq.s32.totalorder %s19, 0
      %p170 = por %p168, %p169
      %s171 = smul.u32 %s20, 2
      %s172 = ssub.s32 1, %s171
      %s173 = smul.u32 %s172, %s21
      %s174 = sadd.s32 %s20, %s173
      %s175 = smul.u32 %s32, 2
      %s176 = ssub.s32 1, %s175
      %s177 = smul.u32 %s176, %s28
      %s178 = sadd.s32 %s32, %s177
      %s179 = ssub.s32 %s174, %s178
      %s180 = ssub.s32 %s20, %s32
      %s181 = sor.u32 %s179, %s180
      %p182 = scmp.eq.s32.totalorder %s181, 0
      %s184 = sadd.s32 %s183, 1
      %s185 = scalar_select %p182, %s183, %s184
      %p188 = pneg %p182
      %p189 = scmp.eq.s32.totalorder %s13, 3
      %p190 = por %p188, %p189
      %p191 = scmp.ne.s32.totalorder %s183, %s186
      %p192 = scmp.eq.s32.totalorder %s13, 0
      %p193 = por %p191, %p192
      %p194 = scmp.ne.s32.totalorder %s183, %s186
      %p195 = scmp.eq.s32.totalorder %s18, 3
      %p196 = por %p194, %p195
      %p197 = scmp.ne.s32.totalorder %s186, %s187
      %p198 = scmp.eq.s32.totalorder %s18, 0
      %p199 = por %p197, %p198
      %p200 = scmp.ne.s32.totalorder %s186, %s187
      %p201 = scmp.eq.s32.totalorder %s19, 3
      %p202 = por %p200, %p201
      %p204 = scmp.ne.s32.totalorder %s187, %s203
      %p205 = scmp.eq.s32.totalorder %s19, 0
      %p206 = por %p204, %p205
      %s207 = ssub.s32 %s20, %s32
      %p208 = scmp.eq.s32.totalorder %s207, 0
      %s210 = sadd.s32 %s209, 1
      %s211 = scalar_select %p208, %s209, %s210
      %p214 = pneg %p208
      %p215 = scmp.eq.s32.totalorder %s13, 3
      %p216 = por %p214, %p215
      %p217 = scmp.ne.s32.totalorder %s209, %s212
      %p218 = scmp.eq.s32.totalorder %s13, 0
      %p219 = por %p217, %p218
      %p220 = scmp.ne.s32.totalorder %s209, %s212
      %p221 = scmp.eq.s32.totalorder %s18, 3
      %p222 = por %p220, %p221
      %p223 = scmp.ne.s32.totalorder %s212, %s213
      %p224 = scmp.eq.s32.totalorder %s18, 0
      %p225 = por %p223, %p224
      %p226 = scmp.ne.s32.totalorder %s212, %s213
      %p227 = scmp.eq.s32.totalorder %s19, 3
      %p228 = por %p226, %p227
      %p230 = scmp.ne.s32.totalorder %s213, %s229
      %p231 = scmp.eq.s32.totalorder %s19, 0
      %p232 = por %p230, %p231
      %p233 = scmp.le.s32.totalorder 1, %s13
      %p234 = scmp.lt.s32.totalorder %s13, 5
      %p235 = pnand %p233, %p234
      %p236 = pneg %p235
      // Predicated region
      $region9: #{encoder_forward.1} parent=5 // pred_check
        _
      $region10: #{encoder_forward.1} parent=5 // pred_check_branch
        %238 = sbr.rel (%p235) target = $region12
      $region11: #{encoder_forward.1} parent=5 // pred_region
        %s239 = ssub.s32 %s13, 1
      $region12: #{encoder_forward.1} parent=5 // pred_fallthru
        _
      %p240 = scmp.lt.s32.totalorder %s13, 4
      // Predicated region
      $region13: #{encoder_forward.1} parent=5 // pred_check
        %p241 = pneg %p240
      $region14: #{encoder_forward.1} parent=5 // pred_check_branch
        %243 = sbr.rel (%p241) target = $region16
      $region15: #{encoder_forward.1} parent=5 // pred_region
        // Predicated region
        $region17: #{encoder_forward.1} parent=15 // pred_check
          %p244 = pneg %p53
        $region18: #{encoder_forward.1} parent=15 // pred_check_branch
          %246 = sbr.rel (%p244) target = $region20
        $region19: #{encoder_forward.1} parent=15 // pred_region
          %s247 = smul.u32 %s20, 2
          %s248 = ssub.s32 1, %s247
          %s249 = smul.u32 %s248, %s21
          %s250 = sadd.s32 %s20, %s249
          %s251 = smul.u32 4, %s250
          %p252 = scmp.lt.s32.totalorder %s251, 7
          %s253 = scalar_select %p252, %s251, 7
          %s254 = smul.addr %s253, 4
          %s255 = scalar_lea.vmem %s0, %s254
          %s256 = smul.u32 %s20, 2
          %s257 = ssub.s32 1, %s256
          %s258 = smul.u32 %s257, %s21
          %s259 = sadd.s32 %s20, %s258
          %s260 = smul.u32 4, %s259
        $region20: #{encoder_forward.1} parent=15 // pred_fallthru
          _
        // Predicated region
        $region21: #{encoder_forward.1} parent=15 // pred_check
          %p261 = pneg %p79
        $region22: #{encoder_forward.1} parent=15 // pred_check_branch
          %263 = sbr.rel (%p261) target = $region24
        $region23: #{encoder_forward.1} parent=15 // pred_region
          %p264 = scmp.lt.s32.totalorder %s20, 1
          %s265 = scalar_select %p264, %s20, 1
          %s266 = smul.addr %s265, 6
          %s267 = smul.addr %s266, 4
          %s268 = scalar_lea.vmem %s1, %s267
        $region24: #{encoder_forward.1} parent=15 // pred_fallthru
          _
        // Predicated region
        $region25: #{encoder_forward.1} parent=15 // pred_check
          %p269 = pneg %p105
        $region26: #{encoder_forward.1} parent=15 // pred_check_branch
          %271 = sbr.rel (%p269) target = $region28
        $region27: #{encoder_forward.1} parent=15 // pred_region
          %p272 = scmp.lt.s32.totalorder %s20, 1
          %s273 = scalar_select %p272, %s20, 1
          %s274 = smul.addr %s273, 48
          %s275 = smul.addr %s274, 8
          %s276 = scalar_lea.vmem %s2, %s275
        $region28: #{encoder_forward.1} parent=15 // pred_fallthru
          _
        // Predicated region
        $region29: #{encoder_forward.1} parent=15 // pred_check
          %p277 = pneg %p131
        $region30: #{encoder_forward.1} parent=15 // pred_check_branch
          %279 = sbr.rel (%p277) target = $region32
        $region31: #{encoder_forward.1} parent=15 // pred_region
          %p280 = scmp.lt.s32.totalorder %s20, 1
          %s281 = scalar_select %p280, %s20, 1
          %s282 = smul.addr %s281, 3
          %s283 = scalar_lea.vmem %s3, %s282
        $region32: #{encoder_forward.1} parent=15 // pred_fallthru
          _
        // Predicated region
        $region33: #{encoder_forward.1} parent=15 // pred_check
          %p284 = pneg %p157
        $region34: #{encoder_forward.1} parent=15 // pred_check_branch
          %286 = sbr.rel (%p284) target = $region36
        $region35: #{encoder_forward.1} parent=15 // pred_region
          %p287 = scmp.lt.s32.totalorder %s20, 1
          %s288 = scalar_select %p287, %s20, 1
          %s289 = scalar_lea.vmem %s4, %s288
        $region36: #{encoder_forward.1} parent=15 // pred_fallthru
          _
      $region16: #{encoder_forward.1} parent=5 // pred_fallthru
        _
      %p290 = scmp.le.s32.totalorder 1, %s13
      %p291 = scmp.lt.s32.totalorder %s13, 5
      %p292 = pnand %p290, %p291
      %p293 = pneg %p292
      // Predicated region
      $region37: #{encoder_forward.1} parent=5 // pred_check
        _
      $region38: #{encoder_forward.1} parent=5 // pred_check_branch
        %295 = sbr.rel (%p292) target = $region40
      $region39: #{encoder_forward.1} parent=5 // pred_region
        %s296 = ssub.s32 %s13, 1
        %s297 = smul.u32 %s22, 2
        %s298 = ssub.s32 1, %s297
        %s299 = smul.u32 %s298, %s23
        %s300 = sadd.s32 %s22, %s299
        %s301 = smul.u32 4, %s300
        %p302 = scmp.lt.s32.totalorder %s301, 7
        %s303 = scalar_select %p302, %s301, 7
        %s304 = smul.addr %s303, 4
        %s305 = scalar_lea.vmem %s0, %s304
        %p306 = pneg %p59
        %p307 = pneg %p56
        %p308 = scmp.lt.s32.totalorder %s22, 1
        %s309 = scalar_select %p308, %s22, 1
        %s310 = smul.addr %s309, 6
        %s311 = smul.addr %s310, 4
        %s312 = scalar_lea.vmem %s1, %s311
        %p313 = pneg %p85
        %p314 = pneg %p82
        %p315 = scmp.lt.s32.totalorder %s22, 1
        %s316 = scalar_select %p315, %s22, 1
        %s317 = smul.addr %s316, 48
        %s318 = smul.addr %s317, 8
        %s319 = scalar_lea.vmem %s2, %s318
        %p320 = pneg %p111
        %p321 = pneg %p108
        %p322 = scmp.lt.s32.totalorder %s22, 1
        %s323 = scalar_select %p322, %s22, 1
        %s324 = smul.addr %s323, 3
        %s325 = scalar_lea.vmem %s3, %s324
        %p326 = pneg %p137
        %p327 = pneg %p134
        %p328 = scmp.lt.s32.totalorder %s22, 1
        %s329 = scalar_select %p328, %s22, 1
        %s330 = scalar_lea.vmem %s4, %s329
        %p331 = pneg %p163
        %p332 = pneg %p160
        %p333 = pneg %p199
        %p334 = pneg %p196
        %s335 = sand.u32 %s186, 1
        %s336 = sand.u32 %s186, 1
        %s337 = smul.addr %s336, 32
        %s338 = scalar_lea.vmem [#allocation4], %s337
        %p339 = pneg %p225
        %p340 = pneg %p222
        %p341 = scmp.lt.s32.totalorder %s22, 1
        %s342 = scalar_select %p341, %s22, 1
        %s343 = smul.addr %s342, 8
        %s344 = scalar_lea.vmem %s6, %s343
        %s345 = smul.u32 %s22, 2
        %s346 = ssub.s32 1, %s345
        %s347 = smul.u32 %s346, %s23
        %s348 = sadd.s32 %s22, %s347
        %s349 = smul.u32 4, %s348
        %p350 = scmp.lt.s32.totalorder %s349, 7
        %s351 = scalar_select %p350, %s349, 7
        %s352 = smul.addr %s351, 4
        %s353 = scalar_lea.vmem %s0, %s352
        %s354 = smul.u32 %s22, 2
        %s355 = ssub.s32 1, %s354
        %s356 = smul.u32 %s355, %s23
        %s357 = sadd.s32 %s22, %s356
        %s358 = smul.u32 4, %s357
        %p359 = scmp.lt.s32.totalorder %s22, 1
        %s360 = scalar_select %p359, %s22, 1
        %s361 = smul.addr %s360, 6
        %s362 = smul.addr %s361, 4
        %s363 = scalar_lea.vmem %s1, %s362
        %p364 = scmp.lt.s32.totalorder %s22, 1
        %s365 = scalar_select %p364, %s22, 1
        %s366 = smul.addr %s365, 48
        %s367 = smul.addr %s366, 8
        %s368 = scalar_lea.vmem %s2, %s367
        %p369 = scmp.lt.s32.totalorder %s22, 1
        %s370 = scalar_select %p369, %s22, 1
        %s371 = smul.addr %s370, 3
        %s372 = scalar_lea.vmem %s3, %s371
        %p373 = scmp.lt.s32.totalorder %s22, 1
        %s374 = scalar_select %p373, %s22, 1
        %s375 = scalar_lea.vmem %s4, %s374
        %s376 = smul.u32 %s22, 2
        %s377 = ssub.s32 1, %s376
        %s378 = smul.u32 %s377, %s23
        %s379 = sadd.s32 %s22, %s378
        %s380 = smul.u32 4, %s379
        %p381 = scmp.lt.s32.totalorder %s22, 1
        %s382 = scalar_select %p381, %s22, 1
        %s383 = smul.addr %s382, 8
        %s384 = scalar_lea.vmem %s6, %s383
        %p386 = scmp.eq.s32.totalorder %s23, 0
        // Predicated region
        $region41: #{encoder_forward.1} parent=39 // pred_check
          %p387 = pneg %p386
        $region42: #{encoder_forward.1} parent=39 // pred_check_branch
          %389 = sbr.rel (%p387) target = $region44
        $region43: #{encoder_forward.1} parent=39 // pred_region
          %390 = vst [vmem:[#allocation2] sm:$0xff] 0.0
        $region44: #{encoder_forward.1} parent=39 // pred_fallthru
          _
        %v391 = vld [vmem:[%s353] sm:$0xf]
        %v392 = vld [vmem:[%s353 + $0x4] sm:$0xf]
        %v393 = vld [vmem:[%s353 + $0x8] sm:$0xf]
        %v394 = vld [vmem:[%s353 + $0xc] sm:$0xf]
        %v395 = vld [vmem:[%s363] sm:$0xff]
        %v396 = vld [vmem:[%s363 + $0x8] sm:$0xf]
        %v397 = vld [vmem:[%s363 + $0xc] sm:$0xff]
        %v398 = vld [vmem:[%s363 + $0x14] sm:$0xf]
        %v399 = vld [vmem:[%s372] sm:$0x7]
        %v401 = vlaneseq
        %v402 = vshrl.u32 %v401, 7
        %v403 = vsub.s32 0, %v402
        %v404 = vrot.slane %v399, %v403
        %v405 = vlaneseq
        %v406 = vshrl.u32 %v405, 7
        %v407 = vsub.s32 1, %v406
        %v408 = vrot.slane %v399, %v407
        %v409 = vlaneseq
        %v410 = vshrl.u32 %v409, 7
        %v411 = vsub.s32 2, %v410
        %v412 = vrot.slane %v399, %v411
        %v420 = vunpack.c.l.b16 %v391
        %v421 = vunpack.c.l.b16 %v392
        %v422 = vunpack.c.l.b16 %v393
        %v423 = vunpack.c.l.b16 %v394
        %v424 = vpack.c.b16 %v421, %v420
        %v425 = vpack.c.b16 %v423, %v422
        %v430 = vunpack.c.l.b16 %v395
        %v431 = vunpack.c.h.b16 %v395
        %v432 = vunpack.c.l.b16 %v396
        %v433 = vunpack.c.l.b16 %v397
        %v434 = vunpack.c.h.b16 %v397
        %v435 = vunpack.c.l.b16 %v398
        %v436 = vpack.c.b16 %v433, %v430
        %v437 = vpack.c.b16 %v434, %v431
        %v438 = vpack.c.b16 %v435, %v432
        %vm442 = vcmask 130048
        %v444 = vsel %vm442, %v424, 0
        %v447 = vsel %vm442, %v425, 0
        %449 = vmatprep.subr.bf16.mxu0 %v437
        %450 = vmatpush1.bf16.msra.mxu0 %v436
        %451 = vmatprep.subr.bf16.mxu0 0
        %452 = vmatpush1.bf16.msra.mxu0 0
        %453 = vmatprep.subr.bf16.mxu0 0
        %454 = vmatpush1.bf16.msra.mxu0 0
        %455 = vmatprep.subr.bf16.mxu0 0
        %456 = vmatpush1.bf16.msra.mxu0 0
        %457 = vmatprep.subr.bf16.mxu0 0
        %458 = vmatpush1.bf16.msra.mxu0 0
        %459 = vmatprep.subr.bf16.mxu0 0
        %460 = vmatpush1.bf16.msra.mxu0 0
        %461 = vmatprep.subr.bf16.mxu0 0
        %462 = vmatpush1.bf16.msra.mxu0 0
        %463 = vmatprep.subr.bf16.mxu0 0
        %464 = vmatpush1.bf16.msra.mxu0 0
        %465 = vmatprep.subr.bf16.mxu0 0
        %466 = vmatpush1.bf16.msra.mxu0 0
        %467 = vmatprep.subr.bf16.mxu0 0
        %468 = vmatpush1.bf16.msra.mxu0 0
        %469 = vmatprep.subr.bf16.mxu0 0
        %470 = vmatpush1.bf16.msra.mxu0 0
        %471 = vmatprep.subr.bf16.mxu0 0
        %472 = vmatpush1.bf16.msra.mxu0 0
        %473 = vmatprep.subr.bf16.mxu0 0
        %474 = vmatpush1.bf16.msra.mxu0 0
        %475 = vmatprep.subr.bf16.mxu0 0
        %476 = vmatpush1.bf16.msra.mxu0 0
        %477 = vmatprep.subr.bf16.mxu0 0
        %478 = vmatpush1.bf16.msra.mxu0 0
        %479 = vmatprep.subr.bf16.mxu0 0
        %480 = vmatpush1.bf16.msra.mxu0 0
        %481 = vmatprep.mubr.bf16.mxu0 0
        %482 = vmatmul.mubr.bf16.gmra.mrb[0].mxu0 %v444
        %v483 = vpop.f32.mrb[0].mxu0
        %v484 = vadd.f32 %v404, %v483
        %v485 = vpop.f32.mrb[0].mxu0
        %v486 = vadd.f32 %v408, %v485
        %v487 = vpop.f32.mrb[0].mxu0
        %v488 = vadd.f32 %v404, %v487
        %v489 = vpop.f32.mrb[0].mxu0
        %v490 = vadd.f32 %v408, %v489
        %491 = vmatprep.mubr.bf16.mxu0 0
        %492 = vmatmul.mubr.bf16.gmra.mrb[0].mxu0 %v447
        %v493 = vpop.f32.mrb[0].mxu0
        %v494 = vadd.f32 %v404, %v493
        %v495 = vpop.f32.mrb[0].mxu0
        %v496 = vadd.f32 %v408, %v495
        %v497 = vpop.f32.mrb[0].mxu0
        %v498 = vadd.f32 %v404, %v497
        %v499 = vpop.f32.mrb[0].mxu0
        %v500 = vadd.f32 %v408, %v499
        %501 = vdwg.mxu0
        %502 = vmatprep.subr.bf16.mxu0 0
        %503 = vmatpush1.bf16.msra.mxu0 %v438
        %504 = vmatprep.subr.bf16.mxu0 0
        %505 = vmatpush1.bf16.msra.mxu0 0
        %506 = vmatprep.subr.bf16.mxu0 0
        %507 = vmatpush1.bf16.msra.mxu0 0
        %508 = vmatprep.subr.bf16.mxu0 0
        %509 = vmatpush1.bf16.msra.mxu0 0
        %510 = vmatprep.subr.bf16.mxu0 0
        %511 = vmatpush1.bf16.msra.mxu0 0
        %512 = vmatprep.subr.bf16.mxu0 0
        %513 = vmatpush1.bf16.msra.mxu0 0
        %514 = vmatprep.subr.bf16.mxu0 0
        %515 = vmatpush1.bf16.msra.mxu0 0
        %516 = vmatprep.subr.bf16.mxu0 0
        %517 = vmatpush1.bf16.msra.mxu0 0
        %518 = vmatprep.subr.bf16.mxu0 0
        %519 = vmatpush1.bf16.msra.mxu0 0
        %520 = vmatprep.subr.bf16.mxu0 0
        %521 = vmatpush1.bf16.msra.mxu0 0
        %522 = vmatprep.subr.bf16.mxu0 0
        %523 = vmatpush1.bf16.msra.mxu0 0
        %524 = vmatprep.subr.bf16.mxu0 0
        %525 = vmatpush1.bf16.msra.mxu0 0
        %526 = vmatprep.subr.bf16.mxu0 0
        %527 = vmatpush1.bf16.msra.mxu0 0
        %528 = vmatprep.subr.bf16.mxu0 0
        %529 = vmatpush1.bf16.msra.mxu0 0
        %530 = vmatprep.subr.bf16.mxu0 0
        %531 = vmatpush1.bf16.msra.mxu0 0
        %532 = vmatprep.subr.bf16.mxu0 0
        %533 = vmatpush1.bf16.msra.mxu0 0
        %534 = vmatprep.mubr.bf16.mxu0 0
        %535 = vmatmul.mubr.bf16.gmra.mrb[0].mxu0 %v444
        %v536 = vpop.f32.mrb[0].mxu0
        %v537 = vadd.f32 %v412, %v536
        %v538 = vpop.f32.mrb[0].mxu0
        %v539 = vpop.f32.mrb[0].mxu0
        %v540 = vadd.f32 %v412, %v539
        %v541 = vpop.f32.mrb[0].mxu0
        %542 = vmatprep.mubr.bf16.mxu0 0
        %543 = vmatmul.mubr.bf16.gmra.mrb[0].mxu0 %v447
        %v544 = vpop.f32.mrb[0].mxu0
        %v545 = vadd.f32 %v412, %v544
        %v546 = vpop.f32.mrb[0].mxu0
        %v547 = vpop.f32.mrb[0].mxu0
        %v548 = vadd.f32 %v412, %v547
        %v549 = vpop.f32.mrb[0].mxu0
        %550 = vdwg.mxu0
        %551 = vst [vmem:[#allocation3] sm:$0xff] %v484
        %552 = vst [vmem:[#allocation3 + $0x8] sm:$0xff] %v486
        %553 = vst [vmem:[#allocation3 + $0x10] sm:$0xff] %v537
        %554 = vst [vmem:[#allocation3 + $0x18] sm:$0xff] %v488
        %555 = vst [vmem:[#allocation3 + $0x20] sm:$0xff] %v490
        %556 = vst [vmem:[#allocation3 + $0x28] sm:$0xff] %v540
        %557 = vst [vmem:[#allocation3 + $0x30] sm:$0xff] %v494
        %558 = vst [vmem:[#allocation3 + $0x38] sm:$0xff] %v496
        %559 = vst [vmem:[#allocation3 + $0x40] sm:$0xff] %v545
        %560 = vst [vmem:[#allocation3 + $0x48] sm:$0xff] %v498
        %561 = vst [vmem:[#allocation3 + $0x50] sm:$0xff] %v500
        %562 = vst [vmem:[#allocation3 + $0x58] sm:$0xff] %v548
        %v563 = vld [vmem:[%s368] sm:$0xff]
        %v564 = vld [vmem:[%s368 + $0x8] sm:$0xff]
        %v565 = vld [vmem:[%s368 + $0x10] sm:$0xff]
        %v566 = vld [vmem:[%s368 + $0x18] sm:$0xff]
        %v567 = vld [vmem:[%s368 + $0x20] sm:$0xff]
        %v568 = vld [vmem:[%s368 + $0x28] sm:$0xff]
        %v569 = vld [vmem:[%s368 + $0x30] sm:$0xff]
        %v570 = vld [vmem:[%s368 + $0x38] sm:$0xff]
        %v571 = vld [vmem:[%s368 + $0x40] sm:$0xff]
        %v572 = vld [vmem:[%s368 + $0x48] sm:$0xff]
        %v573 = vld [vmem:[%s368 + $0x50] sm:$0xff]
        %v574 = vld [vmem:[%s368 + $0x58] sm:$0xff]
        %v575 = vld [vmem:[%s368 + $0x60] sm:$0xff]
        %v576 = vld [vmem:[%s368 + $0x68] sm:$0xff]
        %v577 = vld [vmem:[%s368 + $0x70] sm:$0xff]
        %v578 = vld [vmem:[%s368 + $0x78] sm:$0xff]
        %v579 = vld [vmem:[%s368 + $0x80] sm:$0xff]
        %v580 = vld [vmem:[%s368 + $0x88] sm:$0xff]
        %v581 = vld [vmem:[%s368 + $0x90] sm:$0xff]
        %v582 = vld [vmem:[%s368 + $0x98] sm:$0xff]
        %v583 = vld [vmem:[%s368 + $0xa0] sm:$0xff]
        %v584 = vld [vmem:[%s368 + $0xa8] sm:$0xff]
        %v585 = vld [vmem:[%s368 + $0xb0] sm:$0xff]
        %v586 = vld [vmem:[%s368 + $0xb8] sm:$0xff]
        %v587 = vld [vmem:[%s368 + $0xc0] sm:$0xff]
        %v588 = vld [vmem:[%s368 + $0xc8] sm:$0xff]
        %v589 = vld [vmem:[%s368 + $0xd0] sm:$0xff]
        %v590 = vld [vmem:[%s368 + $0xd8] sm:$0xff]
        %v591 = vld [vmem:[%s368 + $0xe0] sm:$0xff]
        %v592 = vld [vmem:[%s368 + $0xe8] sm:$0xff]
        %v593 = vld [vmem:[%s368 + $0xf0] sm:$0xff]
        %v594 = vld [vmem:[%s368 + $0xf8] sm:$0xff]
        %v595 = vld [vmem:[%s368 + $0x100] sm:$0xff]
        %v596 = vld [vmem:[%s368 + $0x108] sm:$0xff]
        %v597 = vld [vmem:[%s368 + $0x110] sm:$0xff]
        %v598 = vld [vmem:[%s368 + $0x118] sm:$0xff]
        %v599 = vld [vmem:[%s368 + $0x120] sm:$0xff]
        %v600 = vld [vmem:[%s368 + $0x128] sm:$0xff]
        %v601 = vld [vmem:[%s368 + $0x130] sm:$0xff]
        %v602 = vld [vmem:[%s368 + $0x138] sm:$0xff]
        %v603 = vld [vmem:[%s368 + $0x140] sm:$0xff]
        %v604 = vld [vmem:[%s368 + $0x148] sm:$0xff]
        %v605 = vld [vmem:[%s368 + $0x150] sm:$0xff]
        %v606 = vld [vmem:[%s368 + $0x158] sm:$0xff]
        %v607 = vld [vmem:[%s368 + $0x160] sm:$0xff]
        %v608 = vld [vmem:[%s368 + $0x168] sm:$0xff]
        %v609 = vld [vmem:[%s368 + $0x170] sm:$0xff]
        %v610 = vld [vmem:[%s368 + $0x178] sm:$0xff]
        %v611 = vld [vmem:[%s375] sm:$0x1]
        %v613 = vlaneseq
        %v614 = vshrl.u32 %v613, 7
        %v615 = vsub.s32 0, %v614
        %v616 = vrot.slane %v611, %v615
        %v618 = vld [vmem:[#allocation2] sm:$0xff]
        %s619 = smul.u32 %s22, 3
        %s620 = smul.u32 %s22, 24
        %s621 = sshra.s32 %s620, 3
        %s622 = sand.u32 %s620, 7
        %s623 = smul.u32 %s621, 3
        %s624 = smul.addr %s623, 8
        %s625 = scalar_lea.vmem [#allocation3], %s624
        %v626 = vld [vmem:[%s625] sm:$0xff]
        %v627 = vld [vmem:[%s625 + $0x8] sm:$0xff]
        %v628 = vld [vmem:[%s625 + $0x10] sm:$0xff]
        %629 = vmatprep.subr.mxu0 %v564
        %630 = vmatpush1.msra.mxu0 %v563
        %631 = vmatprep.subr.mxu0 %v567
        %632 = vmatpush1.msra.mxu0 %v566
        %633 = vmatprep.subr.mxu0 %v570
        %634 = vmatpush1.msra.mxu0 %v569
        %635 = vmatprep.subr.mxu0 %v573
        %636 = vmatpush1.msra.mxu0 %v572
        %637 = vmatprep.subr.mxu0 %v576
        %638 = vmatpush1.msra.mxu0 %v575
        %639 = vmatprep.subr.mxu0 %v579
        %640 = vmatpush1.msra.mxu0 %v578
        %641 = vmatprep.subr.mxu0 %v582
        %642 = vmatpush1.msra.mxu0 %v581
        %643 = vmatprep.subr.mxu0 %v585
        %644 = vmatpush1.msra.mxu0 %v584
        %645 = vmatprep.subr.mxu0 %v588
        %646 = vmatpush1.msra.mxu0 %v587
        %647 = vmatprep.subr.mxu0 %v591
        %648 = vmatpush1.msra.mxu0 %v590
        %649 = vmatprep.subr.mxu0 %v594
        %650 = vmatpush1.msra.mxu0 %v593
        %651 = vmatprep.subr.mxu0 %v597
        %652 = vmatpush1.msra.mxu0 %v596
        %653 = vmatprep.subr.mxu0 %v600
        %654 = vmatpush1.msra.mxu0 %v599
        %655 = vmatprep.subr.mxu0 %v603
        %656 = vmatpush1.msra.mxu0 %v602
        %657 = vmatprep.subr.mxu0 %v606
        %658 = vmatpush1.msra.mxu0 %v605
        %659 = vmatprep.subr.mxu0 %v609
        %660 = vmatpush1.msra.mxu0 %v608
        %661 = vmatprep.subr.mxu0 0.0
        %662 = vmatpush1.msra.mxu0 0.0
        %663 = vmatprep.subr.mxu0 0.0
        %664 = vmatpush1.msra.mxu0 0.0
        %665 = vmatprep.subr.mxu0 0.0
        %666 = vmatpush1.msra.mxu0 0.0
        %667 = vmatprep.subr.mxu0 0.0
        %668 = vmatpush1.msra.mxu0 0.0
        %669 = vmatprep.subr.mxu0 0.0
        %670 = vmatpush1.msra.mxu0 0.0
        %671 = vmatprep.subr.mxu0 0.0
        %672 = vmatpush1.msra.mxu0 0.0
        %673 = vmatprep.subr.mxu0 0.0
        %674 = vmatpush1.msra.mxu0 0.0
        %675 = vmatprep.subr.mxu0 0.0
        %676 = vmatpush1.msra.mxu0 0.0
        %677 = vmatprep.subr.mxu0 0.0
        %678 = vmatpush1.msra.mxu0 0.0
        %679 = vmatprep.subr.mxu0 0.0
        %680 = vmatpush1.msra.mxu0 0.0
        %681 = vmatprep.subr.mxu0 0.0
        %682 = vmatpush1.msra.mxu0 0.0
        %683 = vmatprep.subr.mxu0 0.0
        %684 = vmatpush1.msra.mxu0 0.0
        %685 = vmatprep.subr.mxu0 0.0
        %686 = vmatpush1.msra.mxu0 0.0
        %687 = vmatprep.subr.mxu0 0.0
        %688 = vmatpush1.msra.mxu0 0.0
        %689 = vmatprep.subr.mxu0 0.0
        %690 = vmatpush1.msra.mxu0 0.0
        %691 = vmatprep.subr.mxu0 0.0
        %692 = vmatpush1.msra.mxu0 0.0
        %693 = vmatprep.mubr.f32.mxu0 0.0
        %694 = vmatmul.mubr.f32.gmra.mrb[0].mxu0 %v618
        %v695 = vpop.f32.mrb[0].mxu0
        %v696 = vadd.f32 0.0, %v695
        %v697 = vpop.f32.mrb[0].mxu0
        %v698 = vadd.f32 0.0, %v697
        %699 = vdwg.mxu0
        %700 = vmatprep.subr.mxu0 0.0
        %701 = vmatpush1.msra.mxu0 %v565
        %702 = vmatprep.subr.mxu0 0.0
        %703 = vmatpush1.msra.mxu0 %v568
        %704 = vmatprep.subr.mxu0 0.0
        %705 = vmatpush1.msra.mxu0 %v571
        %706 = vmatprep.subr.mxu0 0.0
        %707 = vmatpush1.msra.mxu0 %v574
        %708 = vmatprep.subr.mxu0 0.0
        %709 = vmatpush1.msra.mxu0 %v577
        %710 = vmatprep.subr.mxu0 0.0
        %711 = vmatpush1.msra.mxu0 %v580
        %712 = vmatprep.subr.mxu0 0.0
        %713 = vmatpush1.msra.mxu0 %v583
        %714 = vmatprep.subr.mxu0 0.0
        %715 = vmatpush1.msra.mxu0 %v586
        %716 = vmatprep.subr.mxu0 0.0
        %717 = vmatpush1.msra.mxu0 %v589
        %718 = vmatprep.subr.mxu0 0.0
        %719 = vmatpush1.msra.mxu0 %v592
        %720 = vmatprep.subr.mxu0 0.0
        %721 = vmatpush1.msra.mxu0 %v595
        %722 = vmatprep.subr.mxu0 0.0
        %723 = vmatpush1.msra.mxu0 %v598
        %724 = vmatprep.subr.mxu0 0.0
        %725 = vmatpush1.msra.mxu0 %v601
        %726 = vmatprep.subr.mxu0 0.0
        %727 = vmatpush1.msra.mxu0 %v604
        %728 = vmatprep.subr.mxu0 0.0
        %729 = vmatpush1.msra.mxu0 %v607
        %730 = vmatprep.subr.mxu0 0.0
        %731 = vmatpush1.msra.mxu0 %v610
        %732 = vmatprep.subr.mxu0 0.0
        %733 = vmatpush1.msra.mxu0 0.0
        %734 = vmatprep.subr.mxu0 0.0
        %735 = vmatpush1.msra.mxu0 0.0
        %736 = vmatprep.subr.mxu0 0.0
        %737 = vmatpush1.msra.mxu0 0.0
        %738 = vmatprep.subr.mxu0 0.0
        %739 = vmatpush1.msra.mxu0 0.0
        %740 = vmatprep.subr.mxu0 0.0
        %741 = vmatpush1.msra.mxu0 0.0
        %742 = vmatprep.subr.mxu0 0.0
        %743 = vmatpush1.msra.mxu0 0.0
        %744 = vmatprep.subr.mxu0 0.0
        %745 = vmatpush1.msra.mxu0 0.0
        %746 = vmatprep.subr.mxu0 0.0
        %747 = vmatpush1.msra.mxu0 0.0
        %748 = vmatprep.subr.mxu0 0.0
        %749 = vmatpush1.msra.mxu0 0.0
        %750 = vmatprep.subr.mxu0 0.0
        %751 = vmatpush1.msra.mxu0 0.0
        %752 = vmatprep.subr.mxu0 0.0
        %753 = vmatpush1.msra.mxu0 0.0
        %754 = vmatprep.subr.mxu0 0.0
        %755 = vmatpush1.msra.mxu0 0.0
        %756 = vmatprep.subr.mxu0 0.0
        %757 = vmatpush1.msra.mxu0 0.0
        %758 = vmatprep.subr.mxu0 0.0
        %759 = vmatpush1.msra.mxu0 0.0
        %760 = vmatprep.subr.mxu0 0.0
        %761 = vmatpush1.msra.mxu0 0.0
        %762 = vmatprep.subr.mxu0 0.0
        %763 = vmatpush1.msra.mxu0 0.0
        %764 = vmatprep.mubr.f32.mxu0 0.0
        %765 = vmatmul.mubr.f32.gmra.mrb[0].mxu0 %v618
        %v766 = vpop.f32.mrb[0].mxu0
        %v767 = vadd.f32 0.0, %v766
        %v768 = vpop.f32.mrb[0].mxu0
        %769 = vdwg.mxu0
        %v770 = vadd.f32 %v626, %v696
        %v771 = vxor.u32 %v770, 2147483648
        %v772 = vmul.f32 %v771, 1.442695
        %v773 = vpow.pop %v772
        %v774 = vadd.f32 %v773, 1.0
        %v775 = vrcp.pop %v774
        %v776 = vmul.f32 1.0, %v775
        %v777 = vadd.f32 %v627, %v698
        %v778 = vxor.u32 %v777, 2147483648
        %v779 = vmul.f32 %v778, 1.442695
        %v780 = vpow.pop %v779
        %v781 = vadd.f32 %v780, 1.0
        %v782 = vrcp.pop %v781
        %v783 = vmul.f32 1.0, %v782
        %v784 = vadd.f32 %v767, %v616
        %v785 = vmul.f32 %v776, %v784
        %v786 = vadd.f32 %v628, %v785
        %v787 = vtanh.pop %v786
        %v788 = vsub.f32 1.0, %v783
        %v789 = vmul.f32 %v788, %v787
        %v790 = vmul.f32 %v783, %v618
        %v791 = vadd.f32 %v789, %v790
        %s792 = smul.u32 %s619, 8
        %s793 = scalar_lea.vmem %s338, %s792 [#allocation4]
        %794 = vst [vmem:[%s793] sm:$0xff] %v791
        %s795 = smul.u32 %s22, 2
        %s796 = ssub.s32 1, %s795
        %s797 = sadd.s32 %s619, %s796
        %s798 = smul.u32 %s797, 8
        %s799 = sshra.s32 %s798, 3
        %s800 = sand.u32 %s798, 7
        %s801 = smul.u32 %s799, 3
        %s802 = smul.addr %s801, 8
        %s803 = scalar_lea.vmem [#allocation3], %s802
        %v804 = vld [vmem:[%s803] sm:$0xff]
        %v805 = vld [vmem:[%s803 + $0x8] sm:$0xff]
        %v806 = vld [vmem:[%s803 + $0x10] sm:$0xff]
        %807 = vmatprep.subr.mxu0 %v564
        %808 = vmatpush1.msra.mxu0 %v563
        %809 = vmatprep.subr.mxu0 %v567
        %810 = vmatpush1.msra.mxu0 %v566
        %811 = vmatprep.subr.mxu0 %v570
        %812 = vmatpush1.msra.mxu0 %v569
        %813 = vmatprep.subr.mxu0 %v573
        %814 = vmatpush1.msra.mxu0 %v572
        %815 = vmatprep.subr.mxu0 %v576
        %816 = vmatpush1.msra.mxu0 %v575
        %817 = vmatprep.subr.mxu0 %v579
        %818 = vmatpush1.msra.mxu0 %v578
        %819 = vmatprep.subr.mxu0 %v582
        %820 = vmatpush1.msra.mxu0 %v581
        %821 = vmatprep.subr.mxu0 %v585
        %822 = vmatpush1.msra.mxu0 %v584
        %823 = vmatprep.subr.mxu0 %v588
        %824 = vmatpush1.msra.mxu0 %v587
        %825 = vmatprep.subr.mxu0 %v591
        %826 = vmatpush1.msra.mxu0 %v590
        %827 = vmatprep.subr.mxu0 %v594
        %828 = vmatpush1.msra.mxu0 %v593
        %829 = vmatprep.subr.mxu0 %v597
        %830 = vmatpush1.msra.mxu0 %v596
        %831 = vmatprep.subr.mxu0 %v600
        %832 = vmatpush1.msra.mxu0 %v599
        %833 = vmatprep.subr.mxu0 %v603
        %834 = vmatpush1.msra.mxu0 %v602
        %835 = vmatprep.subr.mxu0 %v606
        %836 = vmatpush1.msra.mxu0 %v605
        %837 = vmatprep.subr.mxu0 %v609
        %838 = vmatpush1.msra.mxu0 %v608
        %839 = vmatprep.subr.mxu0 0.0
        %840 = vmatpush1.msra.mxu0 0.0
        %841 = vmatprep.subr.mxu0 0.0
        %842 = vmatpush1.msra.mxu0 0.0
        %843 = vmatprep.subr.mxu0 0.0
        %844 = vmatpush1.msra.mxu0 0.0
        %845 = vmatprep.subr.mxu0 0.0
        %846 = vmatpush1.msra.mxu0 0.0
        %847 = vmatprep.subr.mxu0 0.0
        %848 = vmatpush1.msra.mxu0 0.0
        %849 = vmatprep.subr.mxu0 0.0
        %850 = vmatpush1.msra.mxu0 0.0
        %851 = vmatprep.subr.mxu0 0.0
        %852 = vmatpush1.msra.mxu0 0.0
        %853 = vmatprep.subr.mxu0 0.0
        %854 = vmatpush1.msra.mxu0 0.0
        %855 = vmatprep.subr.mxu0 0.0
        %856 = vmatpush1.msra.mxu0 0.0
        %857 = vmatprep.subr.mxu0 0.0
        %858 = vmatpush1.msra.mxu0 0.0
        %859 = vmatprep.subr.mxu0 0.0
        %860 = vmatpush1.msra.mxu0 0.0
        %861 = vmatprep.subr.mxu0 0.0
        %862 = vmatpush1.msra.mxu0 0.0
        %863 = vmatprep.subr.mxu0 0.0
        %864 = vmatpush1.msra.mxu0 0.0
        %865 = vmatprep.subr.mxu0 0.0
        %866 = vmatpush1.msra.mxu0 0.0
        %867 = vmatprep.subr.mxu0 0.0
        %868 = vmatpush1.msra.mxu0 0.0
        %869 = vmatprep.subr.mxu0 0.0
        %870 = vmatpush1.msra.mxu0 0.0
        %871 = vmatprep.mubr.f32.mxu0 0.0
        %872 = vmatmul.mubr.f32.gmra.mrb[0].mxu0 %v791
        %v873 = vpop.f32.mrb[0].mxu0
        %v874 = vadd.f32 0.0, %v873
        %v875 = vpop.f32.mrb[0].mxu0
        %v876 = vadd.f32 0.0, %v875
        %877 = vdwg.mxu0
        %878 = vmatprep.subr.mxu0 0.0
        %879 = vmatpush1.msra.mxu0 %v565
        %880 = vmatprep.subr.mxu0 0.0
        %881 = vmatpush1.msra.mxu0 %v568
        %882 = vmatprep.subr.mxu0 0.0
        %883 = vmatpush1.msra.mxu0 %v571
        %884 = vmatprep.subr.mxu0 0.0
        %885 = vmatpush1.msra.mxu0 %v574
        %886 = vmatprep.subr.mxu0 0.0
        %887 = vmatpush1.msra.mxu0 %v577
        %888 = vmatprep.subr.mxu0 0.0
        %889 = vmatpush1.msra.mxu0 %v580
        %890 = vmatprep.subr.mxu0 0.0
        %891 = vmatpush1.msra.mxu0 %v583
        %892 = vmatprep.subr.mxu0 0.0
        %893 = vmatpush1.msra.mxu0 %v586
        %894 = vmatprep.subr.mxu0 0.0
        %895 = vmatpush1.msra.mxu0 %v589
        %896 = vmatprep.subr.mxu0 0.0
        %897 = vmatpush1.msra.mxu0 %v592
        %898 = vmatprep.subr.mxu0 0.0
        %899 = vmatpush1.msra.mxu0 %v595
        %900 = vmatprep.subr.mxu0 0.0
        %901 = vmatpush1.msra.mxu0 %v598
        %902 = vmatprep.subr.mxu0 0.0
        %903 = vmatpush1.msra.mxu0 %v601
        %904 = vmatprep.subr.mxu0 0.0
        %905 = vmatpush1.msra.mxu0 %v604
        %906 = vmatprep.subr.mxu0 0.0
        %907 = vmatpush1.msra.mxu0 %v607
        %908 = vmatprep.subr.mxu0 0.0
        %909 = vmatpush1.msra.mxu0 %v610
        %910 = vmatprep.subr.mxu0 0.0
        %911 = vmatpush1.msra.mxu0 0.0
        %912 = vmatprep.subr.mxu0 0.0
        %913 = vmatpush1.msra.mxu0 0.0
        %914 = vmatprep.subr.mxu0 0.0
        %915 = vmatpush1.msra.mxu0 0.0
        %916 = vmatprep.subr.mxu0 0.0
        %917 = vmatpush1.msra.mxu0 0.0
        %918 = vmatprep.subr.mxu0 0.0
        %919 = vmatpush1.msra.mxu0 0.0
        %920 = vmatprep.subr.mxu0 0.0
        %921 = vmatpush1.msra.mxu0 0.0
        %922 = vmatprep.subr.mxu0 0.0
        %923 = vmatpush1.msra.mxu0 0.0
        %924 = vmatprep.subr.mxu0 0.0
        %925 = vmatpush1.msra.mxu0 0.0
        %926 = vmatprep.subr.mxu0 0.0
        %927 = vmatpush1.msra.mxu0 0.0
        %928 = vmatprep.subr.mxu0 0.0
        %929 = vmatpush1.msra.mxu0 0.0
        %930 = vmatprep.subr.mxu0 0.0
        %931 = vmatpush1.msra.mxu0 0.0
        %932 = vmatprep.subr.mxu0 0.0
        %933 = vmatpush1.msra.mxu0 0.0
        %934 = vmatprep.subr.mxu0 0.0
        %935 = vmatpush1.msra.mxu0 0.0
        %936 = vmatprep.subr.mxu0 0.0
        %937 = vmatpush1.msra.mxu0 0.0
        %938 = vmatprep.subr.mxu0 0.0
        %939 = vmatpush1.msra.mxu0 0.0
        %940 = vmatprep.subr.mxu0 0.0
        %941 = vmatpush1.msra.mxu0 0.0
        %942 = vmatprep.mubr.f32.mxu0 0.0
        %943 = vmatmul.mubr.f32.gmra.mrb[0].mxu0 %v791
        %v944 = vpop.f32.mrb[0].mxu0
        %v945 = vadd.f32 0.0, %v944
        %v946 = vpop.f32.mrb[0].mxu0
        %947 = vdwg.mxu0
        %v948 = vadd.f32 %v804, %v874
        %v949 = vxor.u32 %v948, 2147483648
        %v950 = vmul.f32 %v949, 1.442695
        %v951 = vpow.pop %v950
        %v952 = vadd.f32 %v951, 1.0
        %v953 = vrcp.pop %v952
        %v954 = vmul.f32 1.0, %v953
        %v955 = vadd.f32 %v805, %v876
        %v956 = vxor.u32 %v955, 2147483648
        %v957 = vmul.f32 %v956, 1.442695
        %v958 = vpow.pop %v957
        %v959 = vadd.f32 %v958, 1.0
        %v960 = vrcp.pop %v959
        %v961 = vmul.f32 1.0, %v960
        %v962 = vadd.f32 %v945, %v616
        %v963 = vmul.f32 %v954, %v962
        %v964 = vadd.f32 %v806, %v963
        %v965 = vtanh.pop %v964
        %v966 = vsub.f32 1.0, %v961
        %v967 = vmul.f32 %v966, %v965
        %v968 = vmul.f32 %v961, %v791
        %v969 = vadd.f32 %v967, %v968
        %s970 = scalar_lea.vmem %s338, %s798 [#allocation4]
        %971 = vst [vmem:[%s970] sm:$0xff] %v969
        %s972 = smul.u32 %s796, 2
        %s973 = sadd.s32 %s619, %s972
        %s974 = smul.u32 %s973, 8
        %s975 = sshra.s32 %s974, 3
        %s976 = sand.u32 %s974, 7
        %s977 = smul.u32 %s975, 3
        %s978 = smul.addr %s977, 8
        %s979 = scalar_lea.vmem [#allocation3], %s978
        %v980 = vld [vmem:[%s979] sm:$0xff]
        %v981 = vld [vmem:[%s979 + $0x8] sm:$0xff]
        %v982 = vld [vmem:[%s979 + $0x10] sm:$0xff]
        %983 = vmatprep.subr.mxu0 %v564
        %984 = vmatpush1.msra.mxu0 %v563
        %985 = vmatprep.subr.mxu0 %v567
        %986 = vmatpush1.msra.mxu0 %v566
        %987 = vmatprep.subr.mxu0 %v570
        %988 = vmatpush1.msra.mxu0 %v569
        %989 = vmatprep.subr.mxu0 %v573
        %990 = vmatpush1.msra.mxu0 %v572
        %991 = vmatprep.subr.mxu0 %v576
        %992 = vmatpush1.msra.mxu0 %v575
        %993 = vmatprep.subr.mxu0 %v579
        %994 = vmatpush1.msra.mxu0 %v578
        %995 = vmatprep.subr.mxu0 %v582
        %996 = vmatpush1.msra.mxu0 %v581
        %997 = vmatprep.subr.mxu0 %v585
        %998 = vmatpush1.msra.mxu0 %v584
        %999 = vmatprep.subr.mxu0 %v588
        %1000 = vmatpush1.msra.mxu0 %v587
        %1001 = vmatprep.subr.mxu0 %v591
        %1002 = vmatpush1.msra.mxu0 %v590
        %1003 = vmatprep.subr.mxu0 %v594
        %1004 = vmatpush1.msra.mxu0 %v593
        %1005 = vmatprep.subr.mxu0 %v597
        %1006 = vmatpush1.msra.mxu0 %v596
        %1007 = vmatprep.subr.mxu0 %v600
        %1008 = vmatpush1.msra.mxu0 %v599
        %1009 = vmatprep.subr.mxu0 %v603
        %1010 = vmatpush1.msra.mxu0 %v602
        %1011 = vmatprep.subr.mxu0 %v606
        %1012 = vmatpush1.msra.mxu0 %v605
        %1013 = vmatprep.subr.mxu0 %v609
        %1014 = vmatpush1.msra.mxu0 %v608
        %1015 = vmatprep.subr.mxu0 0.0
        %1016 = vmatpush1.msra.mxu0 0.0
        %1017 = vmatprep.subr.mxu0 0.0
        %1018 = vmatpush1.msra.mxu0 0.0
        %1019 = vmatprep.subr.mxu0 0.0
        %1020 = vmatpush1.msra.mxu0 0.0
        %1021 = vmatprep.subr.mxu0 0.0
        %1022 = vmatpush1.msra.mxu0 0.0
        %1023 = vmatprep.subr.mxu0 0.0
        %1024 = vmatpush1.msra.mxu0 0.0
        %1025 = vmatprep.subr.mxu0 0.0
        %1026 = vmatpush1.msra.mxu0 0.0
        %1027 = vmatprep.subr.mxu0 0.0
        %1028 = vmatpush1.msra.mxu0 0.0
        %1029 = vmatprep.subr.mxu0 0.0
        %1030 = vmatpush1.msra.mxu0 0.0
        %1031 = vmatprep.subr.mxu0 0.0
        %1032 = vmatpush1.msra.mxu0 0.0
        %1033 = vmatprep.subr.mxu0 0.0
        %1034 = vmatpush1.msra.mxu0 0.0
        %1035 = vmatprep.subr.mxu0 0.0
        %1036 = vmatpush1.msra.mxu0 0.0
        %1037 = vmatprep.subr.mxu0 0.0
        %1038 = vmatpush1.msra.mxu0 0.0
        %1039 = vmatprep.subr.mxu0 0.0
        %1040 = vmatpush1.msra.mxu0 0.0
        %1041 = vmatprep.subr.mxu0 0.0
        %1042 = vmatpush1.msra.mxu0 0.0
        %1043 = vmatprep.subr.mxu0 0.0
        %1044 = vmatpush1.msra.mxu0 0.0
        %1045 = vmatprep.subr.mxu0 0.0
        %1046 = vmatpush1.msra.mxu0 0.0
        %1047 = vmatprep.mubr.f32.mxu0 0.0
        %1048 = vmatmul.mubr.f32.gmra.mrb[0].mxu0 %v969
        %v1049 = vpop.f32.mrb[0].mxu0
        %v1050 = vadd.f32 0.0, %v1049
        %v1051 = vpop.f32.mrb[0].mxu0
        %v1052 = vadd.f32 0.0, %v1051
        %1053 = vdwg.mxu0
        %1054 = vmatprep.subr.mxu0 0.0
        %1055 = vmatpush1.msra.mxu0 %v565
        %1056 = vmatprep.subr.mxu0 0.0
        %1057 = vmatpush1.msra.mxu0 %v568
        %1058 = vmatprep.subr.mxu0 0.0
        %1059 = vmatpush1.msra.mxu0 %v571
        %1060 = vmatprep.subr.mxu0 0.0
        %1061 = vmatpush1.msra.mxu0 %v574
        %1062 = vmatprep.subr.mxu0 0.0
        %1063 = vmatpush1.msra.mxu0 %v577
        %1064 = vmatprep.subr.mxu0 0.0
        %1065 = vmatpush1.msra.mxu0 %v580
        %1066 = vmatprep.subr.mxu0 0.0
        %1067 = vmatpush1.msra.mxu0 %v583
        %1068 = vmatprep.subr.mxu0 0.0
        %1069 = vmatpush1.msra.mxu0 %v586
        %1070 = vmatprep.subr.mxu0 0.0
        %1071 = vmatpush1.msra.mxu0 %v589
        %1072 = vmatprep.subr.mxu0 0.0
        %1073 = vmatpush1.msra.mxu0 %v592
        %1074 = vmatprep.subr.mxu0 0.0
        %1075 = vmatpush1.msra.mxu0 %v595
        %1076 = vmatprep.subr.mxu0 0.0
        %1077 = vmatpush1.msra.mxu0 %v598
        %1078 = vmatprep.subr.mxu0 0.0
        %1079 = vmatpush1.msra.mxu0 %v601
        %1080 = vmatprep.subr.mxu0 0.0
        %1081 = vmatpush1.msra.mxu0 %v604
        %1082 = vmatprep.subr.mxu0 0.0
        %1083 = vmatpush1.msra.mxu0 %v607
        %1084 = vmatprep.subr.mxu0 0.0
        %1085 = vmatpush1.msra.mxu0 %v610
        %1086 = vmatprep.subr.mxu0 0.0
        %1087 = vmatpush1.msra.mxu0 0.0
        %1088 = vmatprep.subr.mxu0 0.0
        %1089 = vmatpush1.msra.mxu0 0.0
        %1090 = vmatprep.subr.mxu0 0.0
        %1091 = vmatpush1.msra.mxu0 0.0
        %1092 = vmatprep.subr.mxu0 0.0
        %1093 = vmatpush1.msra.mxu0 0.0
        %1094 = vmatprep.subr.mxu0 0.0
        %1095 = vmatpush1.msra.mxu0 0.0
        %1096 = vmatprep.subr.mxu0 0.0
        %1097 = vmatpush1.msra.mxu0 0.0
        %1098 = vmatprep.subr.mxu0 0.0
        %1099 = vmatpush1.msra.mxu0 0.0
        %1100 = vmatprep.subr.mxu0 0.0
        %1101 = vmatpush1.msra.mxu0 0.0
        %1102 = vmatprep.subr.mxu0 0.0
        %1103 = vmatpush1.msra.mxu0 0.0
        %1104 = vmatprep.subr.mxu0 0.0
        %1105 = vmatpush1.msra.mxu0 0.0
        %1106 = vmatprep.subr.mxu0 0.0
        %1107 = vmatpush1.msra.mxu0 0.0
        %1108 = vmatprep.subr.mxu0 0.0
        %1109 = vmatpush1.msra.mxu0 0.0
        %1110 = vmatprep.subr.mxu0 0.0
        %1111 = vmatpush1.msra.mxu0 0.0
        %1112 = vmatprep.subr.mxu0 0.0
        %1113 = vmatpush1.msra.mxu0 0.0
        %1114 = vmatprep.subr.mxu0 0.0
        %1115 = vmatpush1.msra.mxu0 0.0
        %1116 = vmatprep.subr.mxu0 0.0
        %1117 = vmatpush1.msra.mxu0 0.0
        %1118 = vmatprep.mubr.f32.mxu0 0.0
        %1119 = vmatmul.mubr.f32.gmra.mrb[0].mxu0 %v969
        %v1120 = vpop.f32.mrb[0].mxu0
        %v1121 = vadd.f32 0.0, %v1120
        %v1122 = vpop.f32.mrb[0].mxu0
        %1123 = vdwg.mxu0
        %v1124 = vadd.f32 %v980, %v1050
        %v1125 = vxor.u32 %v1124, 2147483648
        %v1126 = vmul.f32 %v1125, 1.442695
        %v1127 = vpow.pop %v1126
        %v1128 = vadd.f32 %v1127, 1.0
        %v1129 = vrcp.pop %v1128
        %v1130 = vmul.f32 1.0, %v1129
        %v1131 = vadd.f32 %v981, %v1052
        %v1132 = vxor.u32 %v1131, 2147483648
        %v1133 = vmul.f32 %v1132, 1.442695
        %v1134 = vpow.pop %v1133
        %v1135 = vadd.f32 %v1134, 1.0
        %v1136 = vrcp.pop %v1135
        %v1137 = vmul.f32 1.0, %v1136
        %v1138 = vadd.f32 %v1121, %v616
        %v1139 = vmul.f32 %v1130, %v1138
        %v1140 = vadd.f32 %v982, %v1139
        %v1141 = vtanh.pop %v1140
        %v1142 = vsub.f32 1.0, %v1137
        %v1143 = vmul.f32 %v1142, %v1141
        %v1144 = vmul.f32 %v1137, %v969
        %v1145 = vadd.f32 %v1143, %v1144
        %s1146 = scalar_lea.vmem %s338, %s974 [#allocation4]
        %1147 = vst [vmem:[%s1146] sm:$0xff] %v1145
        %s1148 = smul.u32 %s796, 3
        %s1149 = sadd.s32 %s619, %s1148
        %s1150 = smul.u32 %s1149, 8
        %s1151 = sshra.s32 %s1150, 3
        %s1152 = sand.u32 %s1150, 7
        %s1153 = smul.u32 %s1151, 3
        %s1154 = smul.addr %s1153, 8
        %s1155 = scalar_lea.vmem [#allocation3], %s1154
        %v1156 = vld [vmem:[%s1155] sm:$0xff]
        %v1157 = vld [vmem:[%s1155 + $0x8] sm:$0xff]
        %v1158 = vld [vmem:[%s1155 + $0x10] sm:$0xff]
        %1159 = vmatprep.subr.mxu0 %v564
        %1160 = vmatpush1.msra.mxu0 %v563
        %1161 = vmatprep.subr.mxu0 %v567
        %1162 = vmatpush1.msra.mxu0 %v566
        %1163 = vmatprep.subr.mxu0 %v570
        %1164 = vmatpush1.msra.mxu0 %v569
        %1165 = vmatprep.subr.mxu0 %v573
        %1166 = vmatpush1.msra.mxu0 %v572
        %1167 = vmatprep.subr.mxu0 %v576
        %1168 = vmatpush1.msra.mxu0 %v575
        %1169 = vmatprep.subr.mxu0 %v579
        %1170 = vmatpush1.msra.mxu0 %v578
        %1171 = vmatprep.subr.mxu0 %v582
        %1172 = vmatpush1.msra.mxu0 %v581
        %1173 = vmatprep.subr.mxu0 %v585
        %1174 = vmatpush1.msra.mxu0 %v584
        %1175 = vmatprep.subr.mxu0 %v588
        %1176 = vmatpush1.msra.mxu0 %v587
        %1177 = vmatprep.subr.mxu0 %v591
        %1178 = vmatpush1.msra.mxu0 %v590
        %1179 = vmatprep.subr.mxu0 %v594
        %1180 = vmatpush1.msra.mxu0 %v593
        %1181 = vmatprep.subr.mxu0 %v597
        %1182 = vmatpush1.msra.mxu0 %v596
        %1183 = vmatprep.subr.mxu0 %v600
        %1184 = vmatpush1.msra.mxu0 %v599
        %1185 = vmatprep.subr.mxu0 %v603
        %1186 = vmatpush1.msra.mxu0 %v602
        %1187 = vmatprep.subr.mxu0 %v606
        %1188 = vmatpush1.msra.mxu0 %v605
        %1189 = vmatprep.subr.mxu0 %v609
        %1190 = vmatpush1.msra.mxu0 %v608
        %1191 = vmatprep.subr.mxu0 0.0
        %1192 = vmatpush1.msra.mxu0 0.0
        %1193 = vmatprep.subr.mxu0 0.0
        %1194 = vmatpush1.msra.mxu0 0.0
        %1195 = vmatprep.subr.mxu0 0.0
        %1196 = vmatpush1.msra.mxu0 0.0
        %1197 = vmatprep.subr.mxu0 0.0
        %1198 = vmatpush1.msra.mxu0 0.0
        %1199 = vmatprep.subr.mxu0 0.0
        %1200 = vmatpush1.msra.mxu0 0.0
        %1201 = vmatprep.subr.mxu0 0.0
        %1202 = vmatpush1.msra.mxu0 0.0
        %1203 = vmatprep.subr.mxu0 0.0
        %1204 = vmatpush1.msra.mxu0 0.0
        %1205 = vmatprep.subr.mxu0 0.0
        %1206 = vmatpush1.msra.mxu0 0.0
        %1207 = vmatprep.subr.mxu0 0.0
        %1208 = vmatpush1.msra.mxu0 0.0
        %1209 = vmatprep.subr.mxu0 0.0
        %1210 = vmatpush1.msra.mxu0 0.0
        %1211 = vmatprep.subr.mxu0 0.0
        %1212 = vmatpush1.msra.mxu0 0.0
        %1213 = vmatprep.subr.mxu0 0.0
        %1214 = vmatpush1.msra.mxu0 0.0
        %1215 = vmatprep.subr.mxu0 0.0
        %1216 = vmatpush1.msra.mxu0 0.0
        %1217 = vmatprep.subr.mxu0 0.0
        %1218 = vmatpush1.msra.mxu0 0.0
        %1219 = vmatprep.subr.mxu0 0.0
        %1220 = vmatpush1.msra.mxu0 0.0
        %1221 = vmatprep.subr.mxu0 0.0
        %1222 = vmatpush1.msra.mxu0 0.0
        %1223 = vmatprep.mubr.f32.mxu0 0.0
        %1224 = vmatmul.mubr.f32.gmra.mrb[0].mxu0 %v1145
        %v1225 = vpop.f32.mrb[0].mxu0
        %v1226 = vadd.f32 0.0, %v1225
        %v1227 = vpop.f32.mrb[0].mxu0
        %v1228 = vadd.f32 0.0, %v1227
        %1229 = vdwg.mxu0
        %1230 = vmatprep.subr.mxu0 0.0
        %1231 = vmatpush1.msra.mxu0 %v565
        %1232 = vmatprep.subr.mxu0 0.0
        %1233 = vmatpush1.msra.mxu0 %v568
        %1234 = vmatprep.subr.mxu0 0.0
        %1235 = vmatpush1.msra.mxu0 %v571
        %1236 = vmatprep.subr.mxu0 0.0
        %1237 = vmatpush1.msra.mxu0 %v574
        %1238 = vmatprep.subr.mxu0 0.0
        %1239 = vmatpush1.msra.mxu0 %v577
        %1240 = vmatprep.subr.mxu0 0.0
        %1241 = vmatpush1.msra.mxu0 %v580
        %1242 = vmatprep.subr.mxu0 0.0
        %1243 = vmatpush1.msra.mxu0 %v583
        %1244 = vmatprep.subr.mxu0 0.0
        %1245 = vmatpush1.msra.mxu0 %v586
        %1246 = vmatprep.subr.mxu0 0.0
        %1247 = vmatpush1.msra.mxu0 %v589
        %1248 = vmatprep.subr.mxu0 0.0
        %1249 = vmatpush1.msra.mxu0 %v592
        %1250 = vmatprep.subr.mxu0 0.0
        %1251 = vmatpush1.msra.mxu0 %v595
        %1252 = vmatprep.subr.mxu0 0.0
        %1253 = vmatpush1.msra.mxu0 %v598
        %1254 = vmatprep.subr.mxu0 0.0
        %1255 = vmatpush1.msra.mxu0 %v601
        %1256 = vmatprep.subr.mxu0 0.0
        %1257 = vmatpush1.msra.mxu0 %v604
        %1258 = vmatprep.subr.mxu0 0.0
        %1259 = vmatpush1.msra.mxu0 %v607
        %1260 = vmatprep.subr.mxu0 0.0
        %1261 = vmatpush1.msra.mxu0 %v610
        %1262 = vmatprep.subr.mxu0 0.0
        %1263 = vmatpush1.msra.mxu0 0.0
        %1264 = vmatprep.subr.mxu0 0.0
        %1265 = vmatpush1.msra.mxu0 0.0
        %1266 = vmatprep.subr.mxu0 0.0
        %1267 = vmatpush1.msra.mxu0 0.0
        %1268 = vmatprep.subr.mxu0 0.0
        %1269 = vmatpush1.msra.mxu0 0.0
        %1270 = vmatprep.subr.mxu0 0.0
        %1271 = vmatpush1.msra.mxu0 0.0
        %1272 = vmatprep.subr.mxu0 0.0
        %1273 = vmatpush1.msra.mxu0 0.0
        %1274 = vmatprep.subr.mxu0 0.0
        %1275 = vmatpush1.msra.mxu0 0.0
        %1276 = vmatprep.subr.mxu0 0.0
        %1277 = vmatpush1.msra.mxu0 0.0
        %1278 = vmatprep.subr.mxu0 0.0
        %1279 = vmatpush1.msra.mxu0 0.0
        %1280 = vmatprep.subr.mxu0 0.0
        %1281 = vmatpush1.msra.mxu0 0.0
        %1282 = vmatprep.subr.mxu0 0.0
        %1283 = vmatpush1.msra.mxu0 0.0
        %1284 = vmatprep.subr.mxu0 0.0
        %1285 = vmatpush1.msra.mxu0 0.0
        %1286 = vmatprep.subr.mxu0 0.0
        %1287 = vmatpush1.msra.mxu0 0.0
        %1288 = vmatprep.subr.mxu0 0.0
        %1289 = vmatpush1.msra.mxu0 0.0
        %1290 = vmatprep.subr.mxu0 0.0
        %1291 = vmatpush1.msra.mxu0 0.0
        %1292 = vmatprep.subr.mxu0 0.0
        %1293 = vmatpush1.msra.mxu0 0.0
        %1294 = vmatprep.mubr.f32.mxu0 0.0
        %1295 = vmatmul.mubr.f32.gmra.mrb[0].mxu0 %v1145
        %v1296 = vpop.f32.mrb[0].mxu0
        %v1297 = vadd.f32 0.0, %v1296
        %v1298 = vpop.f32.mrb[0].mxu0
        %1299 = vdwg.mxu0
        %v1300 = vadd.f32 %v1156, %v1226
        %v1301 = vxor.u32 %v1300, 2147483648
        %v1302 = vmul.f32 %v1301, 1.442695
        %v1303 = vpow.pop %v1302
        %v1304 = vadd.f32 %v1303, 1.0
        %v1305 = vrcp.pop %v1304
        %v1306 = vmul.f32 1.0, %v1305
        %v1307 = vadd.f32 %v1157, %v1228
        %v1308 = vxor.u32 %v1307, 2147483648
        %v1309 = vmul.f32 %v1308, 1.442695
        %v1310 = vpow.pop %v1309
        %v1311 = vadd.f32 %v1310, 1.0
        %v1312 = vrcp.pop %v1311
        %v1313 = vmul.f32 1.0, %v1312
        %v1314 = vadd.f32 %v1297, %v616
        %v1315 = vmul.f32 %v1306, %v1314
        %v1316 = vadd.f32 %v1158, %v1315
        %v1317 = vtanh.pop %v1316
        %v1318 = vsub.f32 1.0, %v1313
        %v1319 = vmul.f32 %v1318, %v1317
        %v1320 = vmul.f32 %v1313, %v1145
        %v1321 = vadd.f32 %v1319, %v1320
        %s1322 = scalar_lea.vmem %s338, %s1150 [#allocation4]
        %1323 = vst [vmem:[%s1322] sm:$0xff] %v1321
        %1324 = vst [vmem:[#allocation2] sm:$0xff] %v1321
        %1325 = vst [vmem:[%s384] sm:$0xff] %v1321
        %s1326 = sand.u32 %s186, 1
        %s1327 = sand.u32 %s186, 1
        %s1328 = smul.addr %s1327, 32
        %s1329 = scalar_lea.vmem [#allocation4], %s1328
        %p1330 = scmp.lt.s32.totalorder %s22, 1
        %s1331 = scalar_select %p1330, %s22, 1
        %s1332 = smul.addr %s1331, 8
        %s1333 = scalar_lea.vmem %s6, %s1332
        // Predicated region
        $region45: #{encoder_forward.1} parent=39 // pred_check
          %p1334 = pneg %p196
        $region46: #{encoder_forward.1} parent=39 // pred_check_branch
          %1336 = sbr.rel (%p1334) target = $region48
        $region47: #{encoder_forward.1} parent=39 // pred_region
          %s1337 = smul.u32 %s22, 2
          %s1338 = ssub.s32 1, %s1337
          %s1339 = smul.u32 %s1338, %s23
          %s1340 = sadd.s32 %s22, %s1339
          %s1341 = smul.u32 4, %s1340
          %s1342 = smul.addr %s1341, 2
          %s1343 = sadd.s32 %s22, %s1342
          %s1344 = smul.addr %s1343, 8
          %s1345 = scalar_lea.vmem %s5, %s1344
          // Predicated region
          $region49: #{encoder_forward.1} parent=47 // pred_check
            _
          $region50: #{encoder_forward.1} parent=47 // pred_check_branch
            %1347 = sbr.rel (0) target = $region52
          $region51: #{encoder_forward.1} parent=47 // pred_region
            // Predicated region
            $region53: #{encoder_forward.1} parent=51 // pred_check
              _
            $region54: #{encoder_forward.1} parent=51 // pred_check_branch
              %1349 = sbr.rel (0) target = $region56
            $region55: #{encoder_forward.1} parent=51 // pred_region
              // Predicated region
              $region68: #{encoder_forward.1} parent=55 // pred_check
                _
              $region69: #{encoder_forward.1} parent=55 // pred_check_branch
                %1370 = sbr.rel (0) target = $region71
              $region70: #{encoder_forward.1} parent=55 // pred_region
                loop: start=0, step=1, limit=1
                $region72: #{encoder_forward.1} parent=70 // loop_pre_header
                  _
                $region73: #{encoder_forward.1} parent=70 // loop_header
                  %s1372 = sphi 0, %s1376
                  %p1373 = scmp.ge.s32.totalorder %s1372, 1
                  %s1377 = sphi %s1329, %s1329
                  %s1378 = sphi %s1345, %s1345
                $region74: #{encoder_forward.1} parent=70 // loop_header_branch
                  %1375 = sbr.rel (%p1373) target = $region78
                $region75: #{encoder_forward.1} parent=70 // loop_body
                  %v1379 = vld [vmem:[%s1377] sm:$0xff]
                  %1380 = vst [vmem:[%s1378] sm:$0xff] %v1379
                  %v1381 = vld [vmem:[%s1377 + $0x8] sm:$0xff]
                  %1382 = vst [vmem:[%s1378 + $0x10] sm:$0xff] %v1381
                  %v1383 = vld [vmem:[%s1377 + $0x10] sm:$0xff]
                  %1384 = vst [vmem:[%s1378 + $0x20] sm:$0xff] %v1383
                  %v1385 = vld [vmem:[%s1377 + $0x18] sm:$0xff]
                  %1386 = vst [vmem:[%s1378 + $0x30] sm:$0xff] %v1385
                $region76: #{encoder_forward.1} parent=70 // loop_footer
                  %s1376 = sadd.s32 1, %s1372
                $region77: #{encoder_forward.1} parent=70 // loop_footer_branch
                  %1371 = sbr.rel target = $region73
                $region78: #{encoder_forward.1} parent=70 // loop_exit
                  _
              $region71: #{encoder_forward.1} parent=55 // pred_fallthru
                _
              // Predicated region
              $region79: #{encoder_forward.1} parent=55 // pred_check
                _
              $region80: #{encoder_forward.1} parent=55 // pred_check_branch
                %1388 = sbr.rel target = $region82
              $region81: #{encoder_forward.1} parent=55 // pred_region
                _
              $region82: #{encoder_forward.1} parent=55 // pred_fallthru
                _
            $region56: #{encoder_forward.1} parent=51 // pred_fallthru
              _
            // Predicated region
            $region57: #{encoder_forward.1} parent=51 // pred_check
              _
            $region58: #{encoder_forward.1} parent=51 // pred_check_branch
              %1351 = sbr.rel target = $region60
            $region59: #{encoder_forward.1} parent=51 // pred_region
              loop: start=0, step=1, limit=1
              $region61: #{encoder_forward.1} parent=59 // loop_pre_header
                _
              $region62: #{encoder_forward.1} parent=59 // loop_header
                %s1354 = sphi 0, %s1358
                %p1355 = scmp.ge.s32.totalorder %s1354, 1
                %s1359 = sphi %s1329, %s1329
                %s1360 = sphi %s1345, %s1345
              $region63: #{encoder_forward.1} parent=59 // loop_header_branch
                %1357 = sbr.rel (%p1355) target = $region67
              $region64: #{encoder_forward.1} parent=59 // loop_body
                %v1361 = vld [vmem:[%s1359] sm:$0xff]
                %1362 = vst [vmem:[%s1360] sm:$0xff] %v1361
                %v1363 = vld [vmem:[%s1359 + $0x8] sm:$0xff]
                %1364 = vst [vmem:[%s1360 + $0x10] sm:$0xff] %v1363
                %v1365 = vld [vmem:[%s1359 + $0x10] sm:$0xff]
                %1366 = vst [vmem:[%s1360 + $0x20] sm:$0xff] %v1365
                %v1367 = vld [vmem:[%s1359 + $0x18] sm:$0xff]
                %1368 = vst [vmem:[%s1360 + $0x30] sm:$0xff] %v1367
              $region65: #{encoder_forward.1} parent=59 // loop_footer
                %s1358 = sadd.s32 1, %s1354
              $region66: #{encoder_forward.1} parent=59 // loop_footer_branch
                %1353 = sbr.rel target = $region62
              $region67: #{encoder_forward.1} parent=59 // loop_exit
                _
            $region60: #{encoder_forward.1} parent=51 // pred_fallthru
              _
          $region52: #{encoder_forward.1} parent=47 // pred_fallthru
            _
          %1389 = vnop
        $region48: #{encoder_forward.1} parent=39 // pred_fallthru
          _
        // Predicated region
        $region83: #{encoder_forward.1} parent=39 // pred_check
          %p1390 = pneg %p222
        $region84: #{encoder_forward.1} parent=39 // pred_check_branch
          %1392 = sbr.rel (%p1390) target = $region86
        $region85: #{encoder_forward.1} parent=39 // pred_region
          _
        $region86: #{encoder_forward.1} parent=39 // pred_fallthru
          _
      $region40: #{encoder_forward.1} parent=5 // pred_fallthru
        _
      %p1393 = scmp.le.s32.totalorder 2, %s13
      // Predicated region
      $region87: #{encoder_forward.1} parent=5 // pred_check
        %p1394 = pneg %p1393
      $region88: #{encoder_forward.1} parent=5 // pred_check_branch
        %1396 = sbr.rel (%p1394) target = $region90
      $region89: #{encoder_forward.1} parent=5 // pred_region
        %s1397 = ssub.s32 %s13, 2
        // Predicated region
        $region91: #{encoder_forward.1} parent=89 // pred_check
          %p1398 = pneg %p202
        $region92: #{encoder_forward.1} parent=89 // pred_check_branch
          %1400 = sbr.rel (%p1398) target = $region94
        $region93: #{encoder_forward.1} parent=89 // pred_region
          %s1401 = sand.u32 %s187, 1
          %s1402 = sand.u32 %s187, 1
          %s1403 = smul.addr %s1402, 32
          %s1404 = scalar_lea.vmem [#allocation4], %s1403
        $region94: #{encoder_forward.1} parent=89 // pred_fallthru
          _
        // Predicated region
        $region95: #{encoder_forward.1} parent=89 // pred_check
          %p1405 = pneg %p228
        $region96: #{encoder_forward.1} parent=89 // pred_check_branch
          %1407 = sbr.rel (%p1405) target = $region98
        $region97: #{encoder_forward.1} parent=89 // pred_region
          %p1408 = scmp.lt.s32.totalorder %s24, 1
          %s1409 = scalar_select %p1408, %s24, 1
          %s1410 = smul.addr %s1409, 8
          %s1411 = scalar_lea.vmem %s6, %s1410
        $region98: #{encoder_forward.1} parent=89 // pred_fallthru
          _
      $region90: #{encoder_forward.1} parent=5 // pred_fallthru
        _
    $region6: #{encoder_forward.1} parent=1 // loop_footer
      %s17 = sadd.s32 1, %s13
    $region7: #{encoder_forward.1} parent=1 // loop_footer_branch
      %12 = sbr.rel target = $region3
    $region8: #{encoder_forward.1} parent=1 // loop_exit
      _

</llo_original>
